<compile_context>
chip_gen: v6e
topology: v6e:2x2x1
jax: 0.10.0
libtpu: 0.0.40
codegen_flags: <defaults>
</compile_context>

<pallas_src>
import functools

import jax
import jax.numpy as jnp
from jax.experimental import pallas as pl
from jax.experimental.pallas import tpu as pltpu


def _round_up(n, m):
    return ((n + m - 1) // m) * m


# ---------------------------------------------------------------------------
# Fused forward kernel: one grid step == one row-block of Bblk*T frames.
# ---------------------------------------------------------------------------

def _fsmn_fused_kernel(x_ref, win_ref, bin_ref, *rest,
                       num_layers, lorder, rorder, T):
    """x_ref: (M, Din); per layer: proj_w, wl, wr, aff_w, aff_b; o_ref: (M, Do_pad).

    M = Bblk * T rows; row-blocks are always a multiple of T, so every row's
    position inside its own sequence is (row_index % T) and rolls never need to
    read across a sequence boundary (edge rows are masked to zero anyway).
    """
    n_l = 5 * num_layers
    layer_refs = rest[:n_l]
    wout_ref = rest[n_l]
    bout_ref = rest[n_l + 1]
    o_ref = rest[n_l + 2]

    M = x_ref.shape[0]
    # time index of every row inside its own sequence
    tpos = jax.lax.broadcasted_iota(jnp.int32, (M, 1), 0) % T

    mxu_dtype = win_ref.dtype   # bf16 (production) or f32 (strict-check path)

    # Folded in_linear1∘in_linear2 + ReLU.
    h = jnp.dot(x_ref[...].astype(mxu_dtype), win_ref[...],
                preferred_element_type=jnp.float32)
    h = jnp.maximum(h + bin_ref[...], 0.0)                       # (M, Dh_pad) f32

    for li in range(num_layers):
        pw, wl, wr, aw, ab = layer_refs[5 * li:5 * li + 5]

        # LinearTransform (no bias).
        p = jnp.dot(h.astype(mxu_dtype), pw[...],
                    preferred_element_type=jnp.float32)          # (M, P_pad) f32

        # FSMNBlock depthwise memory: identity + causal + anti-causal taps,
        # done in-register with XLU rolls + iota edge masks (no pad scratch).
        acc = p
        wl_all = wl[...]                                         # (lorder, P_pad)
        for k in range(lorder):
            s = lorder - 1 - k                                   # y[t] += wl[k]*x[t-s]
            tap = wl_all[k:k + 1, :]
            if s == 0:
                acc = acc + tap * p
            else:
                shifted = pltpu.roll(p, s % M, axis=0)
                shifted = jnp.where(tpos >= s, shifted, 0.0)
                acc = acc + tap * shifted
        if rorder > 0:
            wr_all = wr[...]                                     # (rorder, P_pad)
            for k in range(rorder):
                s = k + 1                                        # y[t] += wr[k]*x[t+s]
                shifted = pltpu.roll(p, (M - s) % M, axis=0)
                shifted = jnp.where(tpos < T - s, shifted, 0.0)
                acc = acc + wr_all[k:k + 1, :] * shifted

        # AffineTransform + ReLU.
        h = jnp.dot(acc.astype(mxu_dtype), aw[...],
                    preferred_element_type=jnp.float32)
        h = jnp.maximum(h + ab[...], 0.0)

    # Folded out_linear1∘out_linear2 (no nonlinearity between them).
    y = jnp.dot(h.astype(mxu_dtype), wout_ref[...],
                preferred_element_type=jnp.float32)
    o_ref[...] = (y + bout_ref[...]).astype(o_ref.dtype)         # lane-dense store


# ---------------------------------------------------------------------------
# Parameter init (deterministic, synthetic), weight folding/padding, forward
# ---------------------------------------------------------------------------

def init_params(key, cfg):
    """Weights stored as (in_dim, out_dim) so that y = x @ W + b."""
    def nrm(k, shape, scale=0.1):
        return scale * jax.random.normal(k, shape, jnp.float32)

    keys = iter(jax.random.split(key, 8 + 6 * cfg["fsmn_layers"]))
    p = {
        "in1_w": nrm(next(keys), (cfg["input_dim"], cfg["input_affine_dim"])),
        "in1_b": nrm(next(keys), (cfg["input_affine_dim"],)),
        "in2_w": nrm(next(keys), (cfg["input_affine_dim"], cfg["linear_dim"])),
        "in2_b": nrm(next(keys), (cfg["linear_dim"],)),
        "fsmn": [],
        "out1_w": nrm(next(keys), (cfg["linear_dim"], cfg["output_affine_dim"])),
        "out1_b": nrm(next(keys), (cfg["output_affine_dim"],)),
        "out2_w": nrm(next(keys), (cfg["output_affine_dim"], cfg["output_dim"])),
        "out2_b": nrm(next(keys), (cfg["output_dim"],)),
    }
    for _ in range(cfg["fsmn_layers"]):
        layer = {
            # LinearTransform: no bias
            "proj_w": nrm(next(keys), (cfg["linear_dim"], cfg["proj_dim"])),
            # depthwise conv taps: wl[k, p] == conv_left.weight[p, 0, k, 0]
            "wl": nrm(next(keys), (cfg["lorder"], cfg["proj_dim"])),
            "wr": nrm(next(keys), (max(cfg["rorder"], 1), cfg["proj_dim"])),
            "aff_w": nrm(next(keys), (cfg["proj_dim"], cfg["linear_dim"])),
            "aff_b": nrm(next(keys), (cfg["linear_dim"],)),
        }
        p["fsmn"].append(layer)
    return p


def prepare_fused_params(params, cfg, mxu_dtype=jnp.bfloat16):
    """One-time fold of in1∘in2 and out1∘out2 + zero-pad Dh/P/Do to multiples of
    128 lanes + cast matmul weights to the MXU dtype (f32 accumulate in-kernel).
    Taps and biases stay f32 (VPU work).  Exact: padded lanes stay zero end-to-end."""
    assert cfg.get("lstride", 1) == 1 and cfg.get("rstride", 1) == 1, \
        "_build_repeats hard-codes lstride = rstride = 1"
    f32 = jnp.float32
    Din = cfg["input_dim"]
    Dh_p = _round_up(cfg["linear_dim"], 128)
    P_p = _round_up(cfg["proj_dim"], 128)
    Do_p = _round_up(cfg["output_dim"], 128)

    def pad2(w, rows, cols):
        return jnp.pad(w, ((0, rows - w.shape[0]), (0, cols - w.shape[1])))

    win = params["in1_w"] @ params["in2_w"]                               # (Din, Dh)
    bin_ = params["in1_b"] @ params["in2_w"] + params["in2_b"]            # (Dh,)
    wout = params["out1_w"] @ params["out2_w"]                            # (Dh, Do)
    bout = params["out1_b"] @ params["out2_w"] + params["out2_b"]         # (Do,)

    weights = [pad2(win, Din, Dh_p).astype(mxu_dtype),
               pad2(bin_.reshape(1, -1), 1, Dh_p).astype(f32)]
    for layer in params["fsmn"]:
        wr = layer["wr"] if cfg["rorder"] > 0 else jnp.zeros((1, cfg["proj_dim"]), f32)
        weights += [
            pad2(layer["proj_w"], Dh_p, P_p).astype(mxu_dtype),
            pad2(layer["wl"], cfg["lorder"], P_p).astype(f32),
            pad2(wr, max(cfg["rorder"], 1), P_p).astype(f32),
            pad2(layer["aff_w"], P_p, Dh_p).astype(mxu_dtype),
            pad2(layer["aff_b"].reshape(1, -1), 1, Dh_p).astype(f32),
        ]
    weights += [pad2(wout, Dh_p, Do_p).astype(mxu_dtype),
                pad2(bout.reshape(1, -1), 1, Do_p).astype(f32)]
    return weights


def _pick_block_batch(B, T, target_rows=256):
    """Sequences per grid step: block rows = Bblk*T, aiming for ~256 MXU rows,
    keeping >=2 grid steps when B allows (feeds both v7x TensorCores), and
    keeping the row-block a multiple of 8 sublanes (or the full extent)."""
    divisors = [d for d in range(1, B + 1) if B % d == 0]
    cands = [d for d in divisors if (d * T) % 8 == 0 or d == B] or [B]
    best = next((d for d in cands if d * T >= target_rows), cands[-1])
    if best == B and B >= 2:
        proper = [d for d in cands if d < B]
        if proper:
            best = proper[-1]
    return best


def fsmn_forward(x, fused_weights, cfg, in_cache=None):
    """x: (B, T, input_dim) -> (out: (B, T, output_dim), in_cache passthrough)."""
    if in_cache is None:
        in_cache = jnp.zeros((0, 0, 0), jnp.float32)
    B, T, Din = x.shape
    L = cfg["fsmn_layers"]
    lorder, rorder = cfg["lorder"], cfg["rorder"]
    assert cfg.get("lstride", 1) == 1 and cfg.get("rstride", 1) == 1, \
        "_build_repeats hard-codes lstride = rstride = 1"
    Do = cfg["output_dim"]
    Do_pad = _round_up(Do, 128)

    Bblk = _pick_block_batch(B, T)
    Mblk = Bblk * T
    Mtot = B * T
    grid = (Mtot // Mblk,)

    x2 = x.reshape(Mtot, Din).astype(jnp.float32)

    kern = functools.partial(_fsmn_fused_kernel, num_layers=L,
                             lorder=lorder, rorder=rorder, T=T)

    out = pl.pallas_call(
        kern,
        out_shape=jax.ShapeDtypeStruct((Mtot, Do_pad), jnp.float32),
        grid=grid,
        in_specs=[pl.BlockSpec((Mblk, Din), lambda i: (i, 0))]
                 + [pl.BlockSpec(w.shape, lambda i: (0, 0)) for w in fused_weights],
        out_specs=pl.BlockSpec((Mblk, Do_pad), lambda i: (i, 0)),
        compiler_params=pltpu.CompilerParams(
            dimension_semantics=("parallel",),
            vmem_limit_bytes=48 * 1024 * 1024),
    )(x2, *fused_weights)

    out = out[:, :Do].reshape(B, T, Do)   # drop lane padding outside the kernel
    return out, in_cache


# ---------------------------------------------------------------------------
# Pure-JAX reference (unfused, mirrors the PyTorch module) for correctness
# ---------------------------------------------------------------------------

def _ref_memory(p, wl, wr, lorder, rorder):
    B, T, P = p.shape
    out = p
    for k in range(lorder):
        shift = lorder - 1 - k
        shifted = jnp.pad(p, ((0, 0), (shift, 0), (0, 0)))[:, :T, :]
        out = out + wl[k][None, None, :] * shifted
    for k in range(rorder):
        shift = k + 1
        shifted = jnp.pad(p, ((0, 0), (0, shift), (0, 0)))[:, shift:, :]
        out = out + wr[k][None, None, :] * shifted
    return out


def ref_forward(x, params, cfg):
    def lin(h, w, b):
        return h @ w + b[None, None, :]

    h = lin(x, params["in1_w"], params["in1_b"])
    h = jnp.maximum(lin(h, params["in2_w"], params["in2_b"]), 0.0)
    for layer in params["fsmn"]:
        p = h @ layer["proj_w"]
        p = _ref_memory(p, layer["wl"], layer["wr"], cfg["lorder"], cfg["rorder"])
        h = jnp.maximum(lin(p, layer["aff_w"], layer["aff_b"]), 0.0)
    h = lin(h, params["out1_w"], params["out1_b"])
    h = lin(h, params["out2_w"], params["out2_b"])
    return h


# ---------------------------------------------------------------------------
# Main
# ---------------------------------------------------------------------------

if __name__ == "__main__":
    cfg = dict(
        input_dim=16, input_affine_dim=32, fsmn_layers=2, linear_dim=32,
        proj_dim=16, lorder=3, rorder=2, lstride=1, rstride=1,
        output_affine_dim=32, output_dim=8,
    )
    B, T = 2, 8

    key = jax.random.PRNGKey(0)
    kx, kp = jax.random.split(key)
    x = jax.random.normal(kx, (B, T, cfg["input_dim"]), jnp.float32)
    params = init_params(kp, cfg)
    ref = ref_forward(x, params, cfg)

    # f32 MXU path: strict correctness check vs the unfused reference.
    w_f32 = prepare_fused_params(params, cfg, mxu_dtype=jnp.float32)
    out_f32, cache = fsmn_forward(x, w_f32, cfg)
    out_f32 = jax.block_until_ready(out_f32)
    assert out_f32.shape == (B, T, cfg["output_dim"])
    assert jnp.allclose(out_f32, ref, atol=1e-4, rtol=1e-4), "f32 mismatch vs reference"

    # bf16 MXU path (production setting on v5e/v6e/v7x): looser check.
    w_bf16 = prepare_fused_params(params, cfg, mxu_dtype=jnp.bfloat16)
    out_bf16, _ = fsmn_forward(x, w_bf16, cfg)
    out_bf16 = jax.block_until_ready(out_bf16)
    assert out_bf16.shape == (B, T, cfg["output_dim"])
    assert jnp.allclose(out_bf16, ref, atol=1e-2, rtol=1e-1), "bf16 mismatch vs reference"

    print("KERNEL_OK")
</pallas_src>

<mosaic_0001>
module attributes {stable_mosaic.version = 11 : i64} {
  func.func @_fsmn_fused_kernel(%arg0: i32, %arg1: memref<8x16xf32, #tpu.memory_space<vmem>>, %arg2: memref<16x128xf32, #tpu.memory_space<vmem>>, %arg3: memref<1x128xf32, #tpu.memory_space<vmem>>, %arg4: memref<128x128xf32, #tpu.memory_space<vmem>>, %arg5: memref<3x128xf32, #tpu.memory_space<vmem>>, %arg6: memref<2x128xf32, #tpu.memory_space<vmem>>, %arg7: memref<128x128xf32, #tpu.memory_space<vmem>>, %arg8: memref<1x128xf32, #tpu.memory_space<vmem>>, %arg9: memref<128x128xf32, #tpu.memory_space<vmem>>, %arg10: memref<3x128xf32, #tpu.memory_space<vmem>>, %arg11: memref<2x128xf32, #tpu.memory_space<vmem>>, %arg12: memref<128x128xf32, #tpu.memory_space<vmem>>, %arg13: memref<1x128xf32, #tpu.memory_space<vmem>>, %arg14: memref<128x128xf32, #tpu.memory_space<vmem>>, %arg15: memref<1x128xf32, #tpu.memory_space<vmem>>, %arg16: memref<8x128xf32, #tpu.memory_space<vmem>>) attributes {dimension_semantics = [#tpu.dimension_semantics<parallel>], iteration_bounds = array<i64: 2>, scalar_prefetch = 0 : i64, scratch_operands = 0 : i64, tpu.core_type = #tpu.core_type<tc>, window_params = [{transform_indices = @transform_0, window_bounds = array<i64: 8, 16>}, {pipeline_mode = #tpu.pipeline_mode<synchronous>, transform_indices = @transform_1, window_bounds = array<i64: 16, 128>}, {pipeline_mode = #tpu.pipeline_mode<synchronous>, transform_indices = @transform_2, window_bounds = array<i64: 1, 128>}, {pipeline_mode = #tpu.pipeline_mode<synchronous>, transform_indices = @transform_3, window_bounds = array<i64: 128, 128>}, {pipeline_mode = #tpu.pipeline_mode<synchronous>, transform_indices = @transform_4, window_bounds = array<i64: 3, 128>}, {pipeline_mode = #tpu.pipeline_mode<synchronous>, transform_indices = @transform_5, window_bounds = array<i64: 2, 128>}, {pipeline_mode = #tpu.pipeline_mode<synchronous>, transform_indices = @transform_6, window_bounds = array<i64: 128, 128>}, {pipeline_mode = #tpu.pipeline_mode<synchronous>, transform_indices = @transform_7, window_bounds = array<i64: 1, 128>}, {pipeline_mode = #tpu.pipeline_mode<synchronous>, transform_indices = @transform_8, window_bounds = array<i64: 128, 128>}, {pipeline_mode = #tpu.pipeline_mode<synchronous>, transform_indices = @transform_9, window_bounds = array<i64: 3, 128>}, {pipeline_mode = #tpu.pipeline_mode<synchronous>, transform_indices = @transform_10, window_bounds = array<i64: 2, 128>}, {pipeline_mode = #tpu.pipeline_mode<synchronous>, transform_indices = @transform_11, window_bounds = array<i64: 128, 128>}, {pipeline_mode = #tpu.pipeline_mode<synchronous>, transform_indices = @transform_12, window_bounds = array<i64: 1, 128>}, {pipeline_mode = #tpu.pipeline_mode<synchronous>, transform_indices = @transform_13, window_bounds = array<i64: 128, 128>}, {pipeline_mode = #tpu.pipeline_mode<synchronous>, transform_indices = @transform_14, window_bounds = array<i64: 1, 128>}, {transform_indices = @transform_15, window_bounds = array<i64: 8, 128>}]} {
    %0 = tpu.iota {dimensions = array<i32: 0>} : vector<8x1xi32>
    %c8_i32 = arith.constant 8 : i32
    %c0_i32 = arith.constant 0 : i32
    %1 = arith.cmpi eq, %c8_i32, %c0_i32 : i32
    %c1_i32 = arith.constant 1 : i32
    %2 = arith.select %1, %c1_i32, %c8_i32 : i32
    %3 = vector.broadcast %2 : i32 to vector<8x1xi32>
    %4 = arith.remsi %0, %3 : vector<8x1xi32>
    %c0_i32_0 = arith.constant 0 : i32
    %5 = vector.broadcast %c0_i32_0 : i32 to vector<8x1xi32>
    %6 = arith.cmpi ne, %4, %5 : vector<8x1xi32>
    %c0_i32_1 = arith.constant 0 : i32
    %7 = vector.broadcast %c0_i32_1 : i32 to vector<8x1xi32>
    %8 = arith.cmpi slt, %4, %7 : vector<8x1xi32>
    %c0_i32_2 = arith.constant 0 : i32
    %9 = arith.cmpi slt, %2, %c0_i32_2 : i32
    %10 = vector.broadcast %9 : i1 to vector<8x1xi1>
    %11 = vector.broadcast %10 : vector<8x1xi1> to vector<8x1xi1>
    %12 = arith.xori %8, %11 : vector<8x1xi1>
    %13 = arith.andi %12, %6 : vector<8x1xi1>
    %14 = vector.broadcast %2 : i32 to vector<8x1xi32>
    %15 = arith.addi %4, %14 : vector<8x1xi32>
    %16 = arith.select %13, %15, %4 : vector<8x1xi1>, vector<8x1xi32>
    %c0 = arith.constant 0 : index
    %c0_3 = arith.constant 0 : index
    %17 = vector.load %arg1[%c0, %c0_3] : memref<8x16xf32, #tpu.memory_space<vmem>>, vector<8x16xf32>
    %c0_4 = arith.constant 0 : index
    %c0_5 = arith.constant 0 : index
    %18 = vector.load %arg2[%c0_4, %c0_5] : memref<16x128xf32, #tpu.memory_space<vmem>>, vector<16x128xf32>
    %cst = arith.constant dense<0.000000e+00> : vector<8x128xf32>
    %19 = tpu.matmul %17, %18, %cst {dimension_numbers = #tpu.dot_dimension_numbers<[1], [0], [0], [1], [0, 0, 1, 1], [], []>} : vector<8x16xf32>, vector<16x128xf32>, vector<8x128xf32> -> vector<8x128xf32>
    %c0_6 = arith.constant 0 : index
    %c0_7 = arith.constant 0 : index
    %20 = vector.load %arg3[%c0_6, %c0_7] : memref<1x128xf32, #tpu.memory_space<vmem>>, vector<1x128xf32>
    %21 = vector.broadcast %20 : vector<1x128xf32> to vector<8x128xf32>
    %22 = arith.addf %19, %21 : vector<8x128xf32>
    %cst_8 = arith.constant 0.000000e+00 : f32
    %23 = vector.broadcast %cst_8 : f32 to vector<8x128xf32>
    %24 = arith.maximumf %22, %23 : vector<8x128xf32>
    %c0_9 = arith.constant 0 : index
    %c0_10 = arith.constant 0 : index
    %25 = vector.load %arg4[%c0_9, %c0_10] : memref<128x128xf32, #tpu.memory_space<vmem>>, vector<128x128xf32>
    %cst_11 = arith.constant dense<0.000000e+00> : vector<8x128xf32>
    %26 = tpu.matmul %24, %25, %cst_11 {dimension_numbers = #tpu.dot_dimension_numbers<[1], [0], [0], [1], [0, 0, 1, 1], [], []>} : vector<8x128xf32>, vector<128x128xf32>, vector<8x128xf32> -> vector<8x128xf32>
    %c0_12 = arith.constant 0 : index
    %c0_13 = arith.constant 0 : index
    %27 = vector.load %arg5[%c0_12, %c0_13] : memref<3x128xf32, #tpu.memory_space<vmem>>, vector<3x128xf32>
    %28 = vector.extract_strided_slice %27 {offsets = [0, 0], sizes = [1, 128], strides = [1, 1]} : vector<3x128xf32> to vector<1x128xf32>
    %c2_i32 = arith.constant 2 : i32
    %29 = tpu.dynamic_rotate %26 by %c2_i32 dim 0 : vector<8x128xf32>, i32 -> vector<8x128xf32>
    %c2_i32_14 = arith.constant 2 : i32
    %30 = vector.broadcast %c2_i32_14 : i32 to vector<8x1xi32>
    %31 = arith.cmpi sge, %16, %30 : vector<8x1xi32>
    %cst_15 = arith.constant 0.000000e+00 : f32
    %32 = vector.shape_cast %31 : vector<8x1xi1> to vector<8x1xi1>
    %33 = vector.broadcast %32 : vector<8x1xi1> to vector<8x128xi1>
    %34 = vector.broadcast %cst_15 : f32 to vector<8x128xf32>
    %35 = arith.select %33, %29, %34 : vector<8x128xi1>, vector<8x128xf32>
    %36 = vector.broadcast %28 : vector<1x128xf32> to vector<8x128xf32>
    %37 = arith.mulf %36, %35 : vector<8x128xf32>
    %38 = arith.addf %26, %37 : vector<8x128xf32>
    %39 = vector.extract_strided_slice %27 {offsets = [1, 0], sizes = [1, 128], strides = [1, 1]} : vector<3x128xf32> to vector<1x128xf32>
    %c1_i32_16 = arith.constant 1 : i32
    %40 = tpu.dynamic_rotate %26 by %c1_i32_16 dim 0 : vector<8x128xf32>, i32 -> vector<8x128xf32>
    %c1_i32_17 = arith.constant 1 : i32
    %41 = vector.broadcast %c1_i32_17 : i32 to vector<8x1xi32>
    %42 = arith.cmpi sge, %16, %41 : vector<8x1xi32>
    %cst_18 = arith.constant 0.000000e+00 : f32
    %43 = vector.shape_cast %42 : vector<8x1xi1> to vector<8x1xi1>
    %44 = vector.broadcast %43 : vector<8x1xi1> to vector<8x128xi1>
    %45 = vector.broadcast %cst_18 : f32 to vector<8x128xf32>
    %46 = arith.select %44, %40, %45 : vector<8x128xi1>, vector<8x128xf32>
    %47 = vector.broadcast %39 : vector<1x128xf32> to vector<8x128xf32>
    %48 = arith.mulf %47, %46 : vector<8x128xf32>
    %49 = arith.addf %38, %48 : vector<8x128xf32>
    %50 = vector.extract_strided_slice %27 {offsets = [2, 0], sizes = [1, 128], strides = [1, 1]} : vector<3x128xf32> to vector<1x128xf32>
    %51 = vector.broadcast %50 : vector<1x128xf32> to vector<8x128xf32>
    %52 = arith.mulf %51, %26 : vector<8x128xf32>
    %53 = arith.addf %49, %52 : vector<8x128xf32>
    %c0_19 = arith.constant 0 : index
    %c0_20 = arith.constant 0 : index
    %54 = vector.load %arg6[%c0_19, %c0_20] : memref<2x128xf32, #tpu.memory_space<vmem>>, vector<2x128xf32>
    %c7_i32 = arith.constant 7 : i32
    %55 = tpu.dynamic_rotate %26 by %c7_i32 dim 0 : vector<8x128xf32>, i32 -> vector<8x128xf32>
    %c7_i32_21 = arith.constant 7 : i32
    %56 = vector.broadcast %c7_i32_21 : i32 to vector<8x1xi32>
    %57 = arith.cmpi slt, %16, %56 : vector<8x1xi32>
    %cst_22 = arith.constant 0.000000e+00 : f32
    %58 = vector.shape_cast %57 : vector<8x1xi1> to vector<8x1xi1>
    %59 = vector.broadcast %58 : vector<8x1xi1> to vector<8x128xi1>
    %60 = vector.broadcast %cst_22 : f32 to vector<8x128xf32>
    %61 = arith.select %59, %55, %60 : vector<8x128xi1>, vector<8x128xf32>
    %62 = vector.extract_strided_slice %54 {offsets = [0, 0], sizes = [1, 128], strides = [1, 1]} : vector<2x128xf32> to vector<1x128xf32>
    %63 = vector.broadcast %62 : vector<1x128xf32> to vector<8x128xf32>
    %64 = arith.mulf %63, %61 : vector<8x128xf32>
    %65 = arith.addf %53, %64 : vector<8x128xf32>
    %c6_i32 = arith.constant 6 : i32
    %66 = tpu.dynamic_rotate %26 by %c6_i32 dim 0 : vector<8x128xf32>, i32 -> vector<8x128xf32>
    %c6_i32_23 = arith.constant 6 : i32
    %67 = vector.broadcast %c6_i32_23 : i32 to vector<8x1xi32>
    %68 = arith.cmpi slt, %16, %67 : vector<8x1xi32>
    %cst_24 = arith.constant 0.000000e+00 : f32
    %69 = vector.shape_cast %68 : vector<8x1xi1> to vector<8x1xi1>
    %70 = vector.broadcast %69 : vector<8x1xi1> to vector<8x128xi1>
    %71 = vector.broadcast %cst_24 : f32 to vector<8x128xf32>
    %72 = arith.select %70, %66, %71 : vector<8x128xi1>, vector<8x128xf32>
    %73 = vector.extract_strided_slice %54 {offsets = [1, 0], sizes = [1, 128], strides = [1, 1]} : vector<2x128xf32> to vector<1x128xf32>
    %74 = vector.broadcast %73 : vector<1x128xf32> to vector<8x128xf32>
    %75 = arith.mulf %74, %72 : vector<8x128xf32>
    %76 = arith.addf %65, %75 : vector<8x128xf32>
    %c0_25 = arith.constant 0 : index
    %c0_26 = arith.constant 0 : index
    %77 = vector.load %arg7[%c0_25, %c0_26] : memref<128x128xf32, #tpu.memory_space<vmem>>, vector<128x128xf32>
    %cst_27 = arith.constant dense<0.000000e+00> : vector<8x128xf32>
    %78 = tpu.matmul %76, %77, %cst_27 {dimension_numbers = #tpu.dot_dimension_numbers<[1], [0], [0], [1], [0, 0, 1, 1], [], []>} : vector<8x128xf32>, vector<128x128xf32>, vector<8x128xf32> -> vector<8x128xf32>
    %c0_28 = arith.constant 0 : index
    %c0_29 = arith.constant 0 : index
    %79 = vector.load %arg8[%c0_28, %c0_29] : memref<1x128xf32, #tpu.memory_space<vmem>>, vector<1x128xf32>
    %80 = vector.broadcast %79 : vector<1x128xf32> to vector<8x128xf32>
    %81 = arith.addf %78, %80 : vector<8x128xf32>
    %cst_30 = arith.constant 0.000000e+00 : f32
    %82 = vector.broadcast %cst_30 : f32 to vector<8x128xf32>
    %83 = arith.maximumf %81, %82 : vector<8x128xf32>
    %c0_31 = arith.constant 0 : index
    %c0_32 = arith.constant 0 : index
    %84 = vector.load %arg9[%c0_31, %c0_32] : memref<128x128xf32, #tpu.memory_space<vmem>>, vector<128x128xf32>
    %cst_33 = arith.constant dense<0.000000e+00> : vector<8x128xf32>
    %85 = tpu.matmul %83, %84, %cst_33 {dimension_numbers = #tpu.dot_dimension_numbers<[1], [0], [0], [1], [0, 0, 1, 1], [], []>} : vector<8x128xf32>, vector<128x128xf32>, vector<8x128xf32> -> vector<8x128xf32>
    %c0_34 = arith.constant 0 : index
    %c0_35 = arith.constant 0 : index
    %86 = vector.load %arg10[%c0_34, %c0_35] : memref<3x128xf32, #tpu.memory_space<vmem>>, vector<3x128xf32>
    %87 = vector.extract_strided_slice %86 {offsets = [0, 0], sizes = [1, 128], strides = [1, 1]} : vector<3x128xf32> to vector<1x128xf32>
    %c2_i32_36 = arith.constant 2 : i32
    %88 = tpu.dynamic_rotate %85 by %c2_i32_36 dim 0 : vector<8x128xf32>, i32 -> vector<8x128xf32>
    %c2_i32_37 = arith.constant 2 : i32
    %89 = vector.broadcast %c2_i32_37 : i32 to vector<8x1xi32>
    %90 = arith.cmpi sge, %16, %89 : vector<8x1xi32>
    %cst_38 = arith.constant 0.000000e+00 : f32
    %91 = vector.shape_cast %90 : vector<8x1xi1> to vector<8x1xi1>
    %92 = vector.broadcast %91 : vector<8x1xi1> to vector<8x128xi1>
    %93 = vector.broadcast %cst_38 : f32 to vector<8x128xf32>
    %94 = arith.select %92, %88, %93 : vector<8x128xi1>, vector<8x128xf32>
    %95 = vector.broadcast %87 : vector<1x128xf32> to vector<8x128xf32>
    %96 = arith.mulf %95, %94 : vector<8x128xf32>
    %97 = arith.addf %85, %96 : vector<8x128xf32>
    %98 = vector.extract_strided_slice %86 {offsets = [1, 0], sizes = [1, 128], strides = [1, 1]} : vector<3x128xf32> to vector<1x128xf32>
    %c1_i32_39 = arith.constant 1 : i32
    %99 = tpu.dynamic_rotate %85 by %c1_i32_39 dim 0 : vector<8x128xf32>, i32 -> vector<8x128xf32>
    %c1_i32_40 = arith.constant 1 : i32
    %100 = vector.broadcast %c1_i32_40 : i32 to vector<8x1xi32>
    %101 = arith.cmpi sge, %16, %100 : vector<8x1xi32>
    %cst_41 = arith.constant 0.000000e+00 : f32
    %102 = vector.shape_cast %101 : vector<8x1xi1> to vector<8x1xi1>
    %103 = vector.broadcast %102 : vector<8x1xi1> to vector<8x128xi1>
    %104 = vector.broadcast %cst_41 : f32 to vector<8x128xf32>
    %105 = arith.select %103, %99, %104 : vector<8x128xi1>, vector<8x128xf32>
    %106 = vector.broadcast %98 : vector<1x128xf32> to vector<8x128xf32>
    %107 = arith.mulf %106, %105 : vector<8x128xf32>
    %108 = arith.addf %97, %107 : vector<8x128xf32>
    %109 = vector.extract_strided_slice %86 {offsets = [2, 0], sizes = [1, 128], strides = [1, 1]} : vector<3x128xf32> to vector<1x128xf32>
    %110 = vector.broadcast %109 : vector<1x128xf32> to vector<8x128xf32>
    %111 = arith.mulf %110, %85 : vector<8x128xf32>
    %112 = arith.addf %108, %111 : vector<8x128xf32>
    %c0_42 = arith.constant 0 : index
    %c0_43 = arith.constant 0 : index
    %113 = vector.load %arg11[%c0_42, %c0_43] : memref<2x128xf32, #tpu.memory_space<vmem>>, vector<2x128xf32>
    %c7_i32_44 = arith.constant 7 : i32
    %114 = tpu.dynamic_rotate %85 by %c7_i32_44 dim 0 : vector<8x128xf32>, i32 -> vector<8x128xf32>
    %c7_i32_45 = arith.constant 7 : i32
    %115 = vector.broadcast %c7_i32_45 : i32 to vector<8x1xi32>
    %116 = arith.cmpi slt, %16, %115 : vector<8x1xi32>
    %cst_46 = arith.constant 0.000000e+00 : f32
    %117 = vector.shape_cast %116 : vector<8x1xi1> to vector<8x1xi1>
    %118 = vector.broadcast %117 : vector<8x1xi1> to vector<8x128xi1>
    %119 = vector.broadcast %cst_46 : f32 to vector<8x128xf32>
    %120 = arith.select %118, %114, %119 : vector<8x128xi1>, vector<8x128xf32>
    %121 = vector.extract_strided_slice %113 {offsets = [0, 0], sizes = [1, 128], strides = [1, 1]} : vector<2x128xf32> to vector<1x128xf32>
    %122 = vector.broadcast %121 : vector<1x128xf32> to vector<8x128xf32>
    %123 = arith.mulf %122, %120 : vector<8x128xf32>
    %124 = arith.addf %112, %123 : vector<8x128xf32>
    %c6_i32_47 = arith.constant 6 : i32
    %125 = tpu.dynamic_rotate %85 by %c6_i32_47 dim 0 : vector<8x128xf32>, i32 -> vector<8x128xf32>
    %c6_i32_48 = arith.constant 6 : i32
    %126 = vector.broadcast %c6_i32_48 : i32 to vector<8x1xi32>
    %127 = arith.cmpi slt, %16, %126 : vector<8x1xi32>
    %cst_49 = arith.constant 0.000000e+00 : f32
    %128 = vector.shape_cast %127 : vector<8x1xi1> to vector<8x1xi1>
    %129 = vector.broadcast %128 : vector<8x1xi1> to vector<8x128xi1>
    %130 = vector.broadcast %cst_49 : f32 to vector<8x128xf32>
    %131 = arith.select %129, %125, %130 : vector<8x128xi1>, vector<8x128xf32>
    %132 = vector.extract_strided_slice %113 {offsets = [1, 0], sizes = [1, 128], strides = [1, 1]} : vector<2x128xf32> to vector<1x128xf32>
    %133 = vector.broadcast %132 : vector<1x128xf32> to vector<8x128xf32>
    %134 = arith.mulf %133, %131 : vector<8x128xf32>
    %135 = arith.addf %124, %134 : vector<8x128xf32>
    %c0_50 = arith.constant 0 : index
    %c0_51 = arith.constant 0 : index
    %136 = vector.load %arg12[%c0_50, %c0_51] : memref<128x128xf32, #tpu.memory_space<vmem>>, vector<128x128xf32>
    %cst_52 = arith.constant dense<0.000000e+00> : vector<8x128xf32>
    %137 = tpu.matmul %135, %136, %cst_52 {dimension_numbers = #tpu.dot_dimension_numbers<[1], [0], [0], [1], [0, 0, 1, 1], [], []>} : vector<8x128xf32>, vector<128x128xf32>, vector<8x128xf32> -> vector<8x128xf32>
    %c0_53 = arith.constant 0 : index
    %c0_54 = arith.constant 0 : index
    %138 = vector.load %arg13[%c0_53, %c0_54] : memref<1x128xf32, #tpu.memory_space<vmem>>, vector<1x128xf32>
    %139 = vector.broadcast %138 : vector<1x128xf32> to vector<8x128xf32>
    %140 = arith.addf %137, %139 : vector<8x128xf32>
    %cst_55 = arith.constant 0.000000e+00 : f32
    %141 = vector.broadcast %cst_55 : f32 to vector<8x128xf32>
    %142 = arith.maximumf %140, %141 : vector<8x128xf32>
    %c0_56 = arith.constant 0 : index
    %c0_57 = arith.constant 0 : index
    %143 = vector.load %arg14[%c0_56, %c0_57] : memref<128x128xf32, #tpu.memory_space<vmem>>, vector<128x128xf32>
    %cst_58 = arith.constant dense<0.000000e+00> : vector<8x128xf32>
    %144 = tpu.matmul %142, %143, %cst_58 {dimension_numbers = #tpu.dot_dimension_numbers<[1], [0], [0], [1], [0, 0, 1, 1], [], []>} : vector<8x128xf32>, vector<128x128xf32>, vector<8x128xf32> -> vector<8x128xf32>
    %c0_59 = arith.constant 0 : index
    %c0_60 = arith.constant 0 : index
    %145 = vector.load %arg15[%c0_59, %c0_60] : memref<1x128xf32, #tpu.memory_space<vmem>>, vector<1x128xf32>
    %146 = vector.broadcast %145 : vector<1x128xf32> to vector<8x128xf32>
    %147 = arith.addf %144, %146 : vector<8x128xf32>
    %c0_61 = arith.constant 0 : index
    %c0_62 = arith.constant 0 : index
    %148 = vector.load %arg16[%c0_61, %c0_62] : memref<8x128xf32, #tpu.memory_space<vmem>>, vector<8x128xf32>
    tpu.vector_store %arg16[%c0_61, %c0_62], %147 {strides = array<i32>} : memref<8x128xf32, #tpu.memory_space<vmem>>, vector<8x128xf32>,
    return
  }
  func.func @transform_0(%arg0: i32) -> (i32, i32) {
    %c0_i32 = arith.constant 0 : i32
    %c0_i32_0 = arith.constant 0 : i32
    return %arg0, %c0_i32 : i32, i32
  }
  func.func @transform_1(%arg0: i32) -> (i32, i32) {
    %c0_i32 = arith.constant 0 : i32
    %c0_i32_0 = arith.constant 0 : i32
    %c0_i32_1 = arith.constant 0 : i32
    return %c0_i32, %c0_i32_0 : i32, i32
  }
  func.func @transform_2(%arg0: i32) -> (i32, i32) {
    %c0_i32 = arith.constant 0 : i32
    %c0_i32_0 = arith.constant 0 : i32
    %c0_i32_1 = arith.constant 0 : i32
    return %c0_i32, %c0_i32_0 : i32, i32
  }
  func.func @transform_3(%arg0: i32) -> (i32, i32) {
    %c0_i32 = arith.constant 0 : i32
    %c0_i32_0 = arith.constant 0 : i32
    %c0_i32_1 = arith.constant 0 : i32
    return %c0_i32, %c0_i32_0 : i32, i32
  }
  func.func @transform_4(%arg0: i32) -> (i32, i32) {
    %c0_i32 = arith.constant 0 : i32
    %c0_i32_0 = arith.constant 0 : i32
    %c0_i32_1 = arith.constant 0 : i32
    return %c0_i32, %c0_i32_0 : i32, i32
  }
  func.func @transform_5(%arg0: i32) -> (i32, i32) {
    %c0_i32 = arith.constant 0 : i32
    %c0_i32_0 = arith.constant 0 : i32
    %c0_i32_1 = arith.constant 0 : i32
    return %c0_i32, %c0_i32_0 : i32, i32
  }
  func.func @transform_6(%arg0: i32) -> (i32, i32) {
    %c0_i32 = arith.constant 0 : i32
    %c0_i32_0 = arith.constant 0 : i32
    %c0_i32_1 = arith.constant 0 : i32
    return %c0_i32, %c0_i32_0 : i32, i32
  }
  func.func @transform_7(%arg0: i32) -> (i32, i32) {
    %c0_i32 = arith.constant 0 : i32
    %c0_i32_0 = arith.constant 0 : i32
    %c0_i32_1 = arith.constant 0 : i32
    return %c0_i32, %c0_i32_0 : i32, i32
  }
  func.func @transform_8(%arg0: i32) -> (i32, i32) {
    %c0_i32 = arith.constant 0 : i32
    %c0_i32_0 = arith.constant 0 : i32
    %c0_i32_1 = arith.constant 0 : i32
    return %c0_i32, %c0_i32_0 : i32, i32
  }
  func.func @transform_9(%arg0: i32) -> (i32, i32) {
    %c0_i32 = arith.constant 0 : i32
    %c0_i32_0 = arith.constant 0 : i32
    %c0_i32_1 = arith.constant 0 : i32
    return %c0_i32, %c0_i32_0 : i32, i32
  }
  func.func @transform_10(%arg0: i32) -> (i32, i32) {
    %c0_i32 = arith.constant 0 : i32
    %c0_i32_0 = arith.constant 0 : i32
    %c0_i32_1 = arith.constant 0 : i32
    return %c0_i32, %c0_i32_0 : i32, i32
  }
  func.func @transform_11(%arg0: i32) -> (i32, i32) {
    %c0_i32 = arith.constant 0 : i32
    %c0_i32_0 = arith.constant 0 : i32
    %c0_i32_1 = arith.constant 0 : i32
    return %c0_i32, %c0_i32_0 : i32, i32
  }
  func.func @transform_12(%arg0: i32) -> (i32, i32) {
    %c0_i32 = arith.constant 0 : i32
    %c0_i32_0 = arith.constant 0 : i32
    %c0_i32_1 = arith.constant 0 : i32
    return %c0_i32, %c0_i32_0 : i32, i32
  }
  func.func @transform_13(%arg0: i32) -> (i32, i32) {
    %c0_i32 = arith.constant 0 : i32
    %c0_i32_0 = arith.constant 0 : i32
    %c0_i32_1 = arith.constant 0 : i32
    return %c0_i32, %c0_i32_0 : i32, i32
  }
  func.func @transform_14(%arg0: i32) -> (i32, i32) {
    %c0_i32 = arith.constant 0 : i32
    %c0_i32_0 = arith.constant 0 : i32
    %c0_i32_1 = arith.constant 0 : i32
    return %c0_i32, %c0_i32_0 : i32, i32
  }
  func.func @transform_15(%arg0: i32) -> (i32, i32) {
    %c0_i32 = arith.constant 0 : i32
    %c0_i32_0 = arith.constant 0 : i32
    return %arg0, %c0_i32 : i32, i32
  }
}

</mosaic_0001>

<llo_original>
// kernel: tpu_custom_call.1
$region0: #{tpu_custom_call.1}
  #allocation0 [shape = 'u32[]', space=smem, size = 0x4, offset = 0x4, fixed_abs, tag = 'smem constant byte address 0x4 - core index']
  #allocation1 [shape = 'u32[144,128]{1,0:T(1,128)}', space=vmem, size = 0x12000, scoped, tag = 'internal scratch']
  %s0 = inlined_call_operand.hbm [shape: f32[16,16], index: 0, kind: input, shape index: {}]
  %s1 = inlined_call_operand.hbm [shape: f32[16,128], index: 1, kind: input, shape index: {}]
  %s2 = inlined_call_operand.hbm [shape: f32[1,128], index: 2, kind: input, shape index: {}]
  %s3 = inlined_call_operand.hbm [shape: f32[128,128], index: 3, kind: input, shape index: {}]
  %s4 = inlined_call_operand.vmem [shape: f32[3,128], index: 4, kind: input, shape index: {}]
  %s5 = inlined_call_operand.hbm [shape: f32[2,128], index: 5, kind: input, shape index: {}]
  %s6 = inlined_call_operand.hbm [shape: f32[128,128], index: 6, kind: input, shape index: {}]
  %s7 = inlined_call_operand.vmem [shape: f32[1,128], index: 7, kind: input, shape index: {}]
  %s8 = inlined_call_operand.hbm [shape: f32[128,128], index: 8, kind: input, shape index: {}]
  %s9 = inlined_call_operand.vmem [shape: f32[3,128], index: 9, kind: input, shape index: {}]
  %s10 = inlined_call_operand.vmem [shape: f32[2,128], index: 10, kind: input, shape index: {}]
  %s11 = inlined_call_operand.hbm [shape: f32[128,128], index: 11, kind: input, shape index: {}]
  %s12 = inlined_call_operand.vmem [shape: f32[1,128], index: 12, kind: input, shape index: {}]
  %s13 = inlined_call_operand.hbm [shape: f32[128,128], index: 13, kind: input, shape index: {}]
  %s14 = inlined_call_operand.vmem [shape: f32[1,128], index: 14, kind: input, shape index: {}]
  %s15 = inlined_call_operand.hbm [shape: f32[16,128], index: 15, kind: output, shape index: {}]
  %s16 = sld [smem:[#allocation0]]
  $region129: #{tpu_custom_call.1} parent=0
    _
  %s18 = ssub.s32 1, %s16
  %s19 = scalar_select 0, %s18, %s16
  $region1: #{tpu_custom_call.1} parent=0
    #allocation2 [shape = 'u8[8192]{0}', space=vmem, size = 0x2000, scoped, tag = 'input window, operand 0']
    #allocation3 [shape = 's32[2]{0}', space=sflag, size = 0x8, scoped, tag = 'scoped memory for tpu_custom_call.1']
    #allocation4 [shape = 's32[2]{0}', space=sflag, size = 0x8, scoped, tag = 'scoped memory for tpu_custom_call.1']
    #allocation5 [shape = 'u8[8192]{0}', space=vmem, size = 0x2000, scoped, tag = 'input window, operand 1, single buffered']
    #allocation6 [shape = 's32[1]{0}', space=sflag, size = 0x4, scoped, tag = 'scoped memory for tpu_custom_call.1']
    #allocation7 [shape = 'u8[512]{0}', space=vmem, size = 0x400, scoped, tag = 'input window, operand 2, single buffered']
    #allocation8 [shape = 'u8[65536]{0}', space=vmem, size = 0x10000, scoped, tag = 'input window, operand 3, single buffered']
    #allocation9 [shape = 's32[1]{0}', space=sflag, size = 0x4, scoped, tag = 'scoped memory for tpu_custom_call.1']
    #allocation10 [shape = 'u8[1024]{0}', space=vmem, size = 0x400, scoped, tag = 'input window, operand 5, single buffered']
    #allocation11 [shape = 'u8[65536]{0}', space=vmem, size = 0x10000, scoped, tag = 'input window, operand 6, single buffered']
    #allocation12 [shape = 's32[1]{0}', space=sflag, size = 0x4, scoped, tag = 'scoped memory for tpu_custom_call.1']
    #allocation13 [shape = 'u8[65536]{0}', space=vmem, size = 0x10000, scoped, tag = 'input window, operand 8, single buffered']
    #allocation14 [shape = 'u8[65536]{0}', space=vmem, size = 0x10000, scoped, tag = 'input window, operand 11, single buffered']
    #allocation15 [shape = 's32[1]{0}', space=sflag, size = 0x4, scoped, tag = 'scoped memory for tpu_custom_call.1']
    #allocation16 [shape = 'u8[65536]{0}', space=vmem, size = 0x10000, scoped, tag = 'input window, operand 13, single buffered']
    #allocation17 [shape = 'u8[8192]{0}', space=vmem, size = 0x2000, scoped, tag = 'output window, operand 0']
    %20 = vsyncpa [#allocation3], 0
    %s21 = scalar_lea.sflag [#allocation3], 1
    %22 = vsyncpa %s21, 0
    %23 = vsyncpa [#allocation6], 0
    %24 = vsyncpa [#allocation9], 0
    %25 = vsyncpa [#allocation12], 0
    %26 = vsyncpa [#allocation15], 0
    %27 = vsyncpa [#allocation4], 0
    %s28 = scalar_lea.sflag [#allocation4], 1
    %29 = vsyncpa %s28, 0
    loop: start=0, step=1, limit=4
    $region2: #{tpu_custom_call.1} parent=1 // loop_pre_header
      _
    $region3: #{tpu_custom_call.1} parent=1 // loop_header
      %s31 = sphi 0, %s35
      %p32 = scmp.ge.s32.totalorder %s31, 4
      %s41 = sphi 0, %s43
      %s44 = sphi 0, %s41
      %s45 = sphi 0, %s44
      %s61 = sphi 0, %s45
      %s65 = sphi 0, %s65
      %s67 = sphi 0, %s65
      %s68 = sphi 0, %s67
      %s82 = sphi 0, %s68
      %s86 = sphi 0, %s86
      %s88 = sphi 0, %s86
      %s89 = sphi 0, %s88
      %s103 = sphi 0, %s89
      %s107 = sphi 0, %s107
      %s109 = sphi 0, %s107
      %s110 = sphi 0, %s109
      %s124 = sphi 0, %s110
      %s128 = sphi 0, %s128
      %s130 = sphi 0, %s128
      %s131 = sphi 0, %s130
      %s145 = sphi 0, %s131
      %s149 = sphi 0, %s149
      %s151 = sphi 0, %s149
      %s152 = sphi 0, %s151
      %s166 = sphi 0, %s152
      %s170 = sphi 0, %s170
      %s172 = sphi 0, %s170
      %s173 = sphi 0, %s172
      %s187 = sphi 0, %s173
      %s191 = sphi 0, %s191
      %s193 = sphi 0, %s191
      %s194 = sphi 0, %s193
      %s208 = sphi 0, %s194
      %s212 = sphi 0, %s212
      %s214 = sphi 0, %s212
      %s215 = sphi 0, %s214
      %s229 = sphi 0, %s215
      %s233 = sphi 0, %s233
      %s235 = sphi 0, %s233
      %s236 = sphi 0, %s235
      %s250 = sphi 0, %s236
      %s254 = sphi 0, %s254
      %s256 = sphi 0, %s254
      %s257 = sphi 0, %s256
      %s271 = sphi 0, %s257
      %s275 = sphi 0, %s275
      %s277 = sphi 0, %s275
      %s278 = sphi 0, %s277
      %s292 = sphi 0, %s278
      %s296 = sphi 0, %s296
      %s298 = sphi 0, %s296
      %s299 = sphi 0, %s298
      %s313 = sphi 0, %s299
      %s317 = sphi 0, %s317
      %s319 = sphi 0, %s317
      %s320 = sphi 0, %s319
      %s334 = sphi 0, %s320
      %s338 = sphi 0, %s338
      %s340 = sphi 0, %s338
      %s341 = sphi 0, %s340
      %s355 = sphi 0, %s341
      %s361 = sphi 0, %s363
      %s364 = sphi 0, %s361
      %s365 = sphi 0, %s364
      %s381 = sphi 0, %s365
    $region4: #{tpu_custom_call.1} parent=1 // loop_header_branch
      %34 = sbr.rel (%p32) target = $region8
    $region5: #{tpu_custom_call.1} parent=1 // loop_body
      %s36 = ssub.s32 %s31, 1
      %s37 = ssub.s32 %s31, 2
      %s38 = sadd.s32 %s31, 1
      %s39 = ssub.s32 %s31, %s38
      %p40 = scmp.eq.s32.totalorder %s39, 0
      %s42 = sadd.s32 %s41, 1
      %s43 = scalar_select %p40, %s41, %s42
      %p46 = pneg %p40
      %p47 = scmp.eq.s32.totalorder %s31, 1
      %p48 = por %p46, %p47
      %p49 = scmp.ne.s32.totalorder %s41, %s44
      %p50 = scmp.eq.s32.totalorder %s31, 0
      %p51 = por %p49, %p50
      %p52 = scmp.ne.s32.totalorder %s41, %s44
      %p53 = scmp.eq.s32.totalorder %s36, 1
      %p54 = por %p52, %p53
      %p55 = scmp.ne.s32.totalorder %s44, %s45
      %p56 = scmp.eq.s32.totalorder %s36, 0
      %p57 = por %p55, %p56
      %p58 = scmp.ne.s32.totalorder %s44, %s45
      %p59 = scmp.eq.s32.totalorder %s37, 1
      %p60 = por %p58, %p59
      %p62 = scmp.ne.s32.totalorder %s45, %s61
      %p63 = scmp.eq.s32.totalorder %s37, 0
      %p64 = por %p62, %p63
      %s66 = sadd.s32 %s65, 1
      %p69 = scmp.eq.s32.totalorder %s31, 1
      %p70 = scmp.ne.s32.totalorder %s65, %s67
      %p71 = scmp.eq.s32.totalorder %s31, 0
      %p72 = por %p70, %p71
      %p73 = scmp.ne.s32.totalorder %s65, %s67
      %p74 = scmp.eq.s32.totalorder %s36, 1
      %p75 = por %p73, %p74
      %p76 = scmp.ne.s32.totalorder %s67, %s68
      %p77 = scmp.eq.s32.totalorder %s36, 0
      %p78 = por %p76, %p77
      %p79 = scmp.ne.s32.totalorder %s67, %s68
      %p80 = scmp.eq.s32.totalorder %s37, 1
      %p81 = por %p79, %p80
      %p83 = scmp.ne.s32.totalorder %s68, %s82
      %p84 = scmp.eq.s32.totalorder %s37, 0
      %p85 = por %p83, %p84
      %s87 = sadd.s32 %s86, 1
      %p90 = scmp.eq.s32.totalorder %s31, 1
      %p91 = scmp.ne.s32.totalorder %s86, %s88
      %p92 = scmp.eq.s32.totalorder %s31, 0
      %p93 = por %p91, %p92
      %p94 = scmp.ne.s32.totalorder %s86, %s88
      %p95 = scmp.eq.s32.totalorder %s36, 1
      %p96 = por %p94, %p95
      %p97 = scmp.ne.s32.totalorder %s88, %s89
      %p98 = scmp.eq.s32.totalorder %s36, 0
      %p99 = por %p97, %p98
      %p100 = scmp.ne.s32.totalorder %s88, %s89
      %p101 = scmp.eq.s32.totalorder %s37, 1
      %p102 = por %p100, %p101
      %p104 = scmp.ne.s32.totalorder %s89, %s103
      %p105 = scmp.eq.s32.totalorder %s37, 0
      %p106 = por %p104, %p105
      %s108 = sadd.s32 %s107, 1
      %p111 = scmp.eq.s32.totalorder %s31, 1
      %p112 = scmp.ne.s32.totalorder %s107, %s109
      %p113 = scmp.eq.s32.totalorder %s31, 0
      %p114 = por %p112, %p113
      %p115 = scmp.ne.s32.totalorder %s107, %s109
      %p116 = scmp.eq.s32.totalorder %s36, 1
      %p117 = por %p115, %p116
      %p118 = scmp.ne.s32.totalorder %s109, %s110
      %p119 = scmp.eq.s32.totalorder %s36, 0
      %p120 = por %p118, %p119
      %p121 = scmp.ne.s32.totalorder %s109, %s110
      %p122 = scmp.eq.s32.totalorder %s37, 1
      %p123 = por %p121, %p122
      %p125 = scmp.ne.s32.totalorder %s110, %s124
      %p126 = scmp.eq.s32.totalorder %s37, 0
      %p127 = por %p125, %p126
      %s129 = sadd.s32 %s128, 1
      %p132 = scmp.eq.s32.totalorder %s31, 1
      %p133 = scmp.ne.s32.totalorder %s128, %s130
      %p134 = scmp.eq.s32.totalorder %s31, 0
      %p135 = por %p133, %p134
      %p136 = scmp.ne.s32.totalorder %s128, %s130
      %p137 = scmp.eq.s32.totalorder %s36, 1
      %p138 = por %p136, %p137
      %p139 = scmp.ne.s32.totalorder %s130, %s131
      %p140 = scmp.eq.s32.totalorder %s36, 0
      %p141 = por %p139, %p140
      %p142 = scmp.ne.s32.totalorder %s130, %s131
      %p143 = scmp.eq.s32.totalorder %s37, 1
      %p144 = por %p142, %p143
      %p146 = scmp.ne.s32.totalorder %s131, %s145
      %p147 = scmp.eq.s32.totalorder %s37, 0
      %p148 = por %p146, %p147
      %s150 = sadd.s32 %s149, 1
      %p153 = scmp.eq.s32.totalorder %s31, 1
      %p154 = scmp.ne.s32.totalorder %s149, %s151
      %p155 = scmp.eq.s32.totalorder %s31, 0
      %p156 = por %p154, %p155
      %p157 = scmp.ne.s32.totalorder %s149, %s151
      %p158 = scmp.eq.s32.totalorder %s36, 1
      %p159 = por %p157, %p158
      %p160 = scmp.ne.s32.totalorder %s151, %s152
      %p161 = scmp.eq.s32.totalorder %s36, 0
      %p162 = por %p160, %p161
      %p163 = scmp.ne.s32.totalorder %s151, %s152
      %p164 = scmp.eq.s32.totalorder %s37, 1
      %p165 = por %p163, %p164
      %p167 = scmp.ne.s32.totalorder %s152, %s166
      %p168 = scmp.eq.s32.totalorder %s37, 0
      %p169 = por %p167, %p168
      %s171 = sadd.s32 %s170, 1
      %p174 = scmp.eq.s32.totalorder %s31, 1
      %p175 = scmp.ne.s32.totalorder %s170, %s172
      %p176 = scmp.eq.s32.totalorder %s31, 0
      %p177 = por %p175, %p176
      %p178 = scmp.ne.s32.totalorder %s170, %s172
      %p179 = scmp.eq.s32.totalorder %s36, 1
      %p180 = por %p178, %p179
      %p181 = scmp.ne.s32.totalorder %s172, %s173
      %p182 = scmp.eq.s32.totalorder %s36, 0
      %p183 = por %p181, %p182
      %p184 = scmp.ne.s32.totalorder %s172, %s173
      %p185 = scmp.eq.s32.totalorder %s37, 1
      %p186 = por %p184, %p185
      %p188 = scmp.ne.s32.totalorder %s173, %s187
      %p189 = scmp.eq.s32.totalorder %s37, 0
      %p190 = por %p188, %p189
      %s192 = sadd.s32 %s191, 1
      %p195 = scmp.eq.s32.totalorder %s31, 1
      %p196 = scmp.ne.s32.totalorder %s191, %s193
      %p197 = scmp.eq.s32.totalorder %s31, 0
      %p198 = por %p196, %p197
      %p199 = scmp.ne.s32.totalorder %s191, %s193
      %p200 = scmp.eq.s32.totalorder %s36, 1
      %p201 = por %p199, %p200
      %p202 = scmp.ne.s32.totalorder %s193, %s194
      %p203 = scmp.eq.s32.totalorder %s36, 0
      %p204 = por %p202, %p203
      %p205 = scmp.ne.s32.totalorder %s193, %s194
      %p206 = scmp.eq.s32.totalorder %s37, 1
      %p207 = por %p205, %p206
      %p209 = scmp.ne.s32.totalorder %s194, %s208
      %p210 = scmp.eq.s32.totalorder %s37, 0
      %p211 = por %p209, %p210
      %s213 = sadd.s32 %s212, 1
      %p216 = scmp.eq.s32.totalorder %s31, 1
      %p217 = scmp.ne.s32.totalorder %s212, %s214
      %p218 = scmp.eq.s32.totalorder %s31, 0
      %p219 = por %p217, %p218
      %p220 = scmp.ne.s32.totalorder %s212, %s214
      %p221 = scmp.eq.s32.totalorder %s36, 1
      %p222 = por %p220, %p221
      %p223 = scmp.ne.s32.totalorder %s214, %s215
      %p224 = scmp.eq.s32.totalorder %s36, 0
      %p225 = por %p223, %p224
      %p226 = scmp.ne.s32.totalorder %s214, %s215
      %p227 = scmp.eq.s32.totalorder %s37, 1
      %p228 = por %p226, %p227
      %p230 = scmp.ne.s32.totalorder %s215, %s229
      %p231 = scmp.eq.s32.totalorder %s37, 0
      %p232 = por %p230, %p231
      %s234 = sadd.s32 %s233, 1
      %p237 = scmp.eq.s32.totalorder %s31, 1
      %p238 = scmp.ne.s32.totalorder %s233, %s235
      %p239 = scmp.eq.s32.totalorder %s31, 0
      %p240 = por %p238, %p239
      %p241 = scmp.ne.s32.totalorder %s233, %s235
      %p242 = scmp.eq.s32.totalorder %s36, 1
      %p243 = por %p241, %p242
      %p244 = scmp.ne.s32.totalorder %s235, %s236
      %p245 = scmp.eq.s32.totalorder %s36, 0
      %p246 = por %p244, %p245
      %p247 = scmp.ne.s32.totalorder %s235, %s236
      %p248 = scmp.eq.s32.totalorder %s37, 1
      %p249 = por %p247, %p248
      %p251 = scmp.ne.s32.totalorder %s236, %s250
      %p252 = scmp.eq.s32.totalorder %s37, 0
      %p253 = por %p251, %p252
      %s255 = sadd.s32 %s254, 1
      %p258 = scmp.eq.s32.totalorder %s31, 1
      %p259 = scmp.ne.s32.totalorder %s254, %s256
      %p260 = scmp.eq.s32.totalorder %s31, 0
      %p261 = por %p259, %p260
      %p262 = scmp.ne.s32.totalorder %s254, %s256
      %p263 = scmp.eq.s32.totalorder %s36, 1
      %p264 = por %p262, %p263
      %p265 = scmp.ne.s32.totalorder %s256, %s257
      %p266 = scmp.eq.s32.totalorder %s36, 0
      %p267 = por %p265, %p266
      %p268 = scmp.ne.s32.totalorder %s256, %s257
      %p269 = scmp.eq.s32.totalorder %s37, 1
      %p270 = por %p268, %p269
      %p272 = scmp.ne.s32.totalorder %s257, %s271
      %p273 = scmp.eq.s32.totalorder %s37, 0
      %p274 = por %p272, %p273
      %s276 = sadd.s32 %s275, 1
      %p279 = scmp.eq.s32.totalorder %s31, 1
      %p280 = scmp.ne.s32.totalorder %s275, %s277
      %p281 = scmp.eq.s32.totalorder %s31, 0
      %p282 = por %p280, %p281
      %p283 = scmp.ne.s32.totalorder %s275, %s277
      %p284 = scmp.eq.s32.totalorder %s36, 1
      %p285 = por %p283, %p284
      %p286 = scmp.ne.s32.totalorder %s277, %s278
      %p287 = scmp.eq.s32.totalorder %s36, 0
      %p288 = por %p286, %p287
      %p289 = scmp.ne.s32.totalorder %s277, %s278
      %p290 = scmp.eq.s32.totalorder %s37, 1
      %p291 = por %p289, %p290
      %p293 = scmp.ne.s32.totalorder %s278, %s292
      %p294 = scmp.eq.s32.totalorder %s37, 0
      %p295 = por %p293, %p294
      %s297 = sadd.s32 %s296, 1
      %p300 = scmp.eq.s32.totalorder %s31, 1
      %p301 = scmp.ne.s32.totalorder %s296, %s298
      %p302 = scmp.eq.s32.totalorder %s31, 0
      %p303 = por %p301, %p302
      %p304 = scmp.ne.s32.totalorder %s296, %s298
      %p305 = scmp.eq.s32.totalorder %s36, 1
      %p306 = por %p304, %p305
      %p307 = scmp.ne.s32.totalorder %s298, %s299
      %p308 = scmp.eq.s32.totalorder %s36, 0
      %p309 = por %p307, %p308
      %p310 = scmp.ne.s32.totalorder %s298, %s299
      %p311 = scmp.eq.s32.totalorder %s37, 1
      %p312 = por %p310, %p311
      %p314 = scmp.ne.s32.totalorder %s299, %s313
      %p315 = scmp.eq.s32.totalorder %s37, 0
      %p316 = por %p314, %p315
      %s318 = sadd.s32 %s317, 1
      %p321 = scmp.eq.s32.totalorder %s31, 1
      %p322 = scmp.ne.s32.totalorder %s317, %s319
      %p323 = scmp.eq.s32.totalorder %s31, 0
      %p324 = por %p322, %p323
      %p325 = scmp.ne.s32.totalorder %s317, %s319
      %p326 = scmp.eq.s32.totalorder %s36, 1
      %p327 = por %p325, %p326
      %p328 = scmp.ne.s32.totalorder %s319, %s320
      %p329 = scmp.eq.s32.totalorder %s36, 0
      %p330 = por %p328, %p329
      %p331 = scmp.ne.s32.totalorder %s319, %s320
      %p332 = scmp.eq.s32.totalorder %s37, 1
      %p333 = por %p331, %p332
      %p335 = scmp.ne.s32.totalorder %s320, %s334
      %p336 = scmp.eq.s32.totalorder %s37, 0
      %p337 = por %p335, %p336
      %s339 = sadd.s32 %s338, 1
      %p342 = scmp.eq.s32.totalorder %s31, 1
      %p343 = scmp.ne.s32.totalorder %s338, %s340
      %p344 = scmp.eq.s32.totalorder %s31, 0
      %p345 = por %p343, %p344
      %p346 = scmp.ne.s32.totalorder %s338, %s340
      %p347 = scmp.eq.s32.totalorder %s36, 1
      %p348 = por %p346, %p347
      %p349 = scmp.ne.s32.totalorder %s340, %s341
      %p350 = scmp.eq.s32.totalorder %s36, 0
      %p351 = por %p349, %p350
      %p352 = scmp.ne.s32.totalorder %s340, %s341
      %p353 = scmp.eq.s32.totalorder %s37, 1
      %p354 = por %p352, %p353
      %p356 = scmp.ne.s32.totalorder %s341, %s355
      %p357 = scmp.eq.s32.totalorder %s37, 0
      %p358 = por %p356, %p357
      %s359 = ssub.s32 %s31, %s38
      %p360 = scmp.eq.s32.totalorder %s359, 0
      %s362 = sadd.s32 %s361, 1
      %s363 = scalar_select %p360, %s361, %s362
      %p366 = pneg %p360
      %p367 = scmp.eq.s32.totalorder %s31, 1
      %p368 = por %p366, %p367
      %p369 = scmp.ne.s32.totalorder %s361, %s364
      %p370 = scmp.eq.s32.totalorder %s31, 0
      %p371 = por %p369, %p370
      %p372 = scmp.ne.s32.totalorder %s361, %s364
      %p373 = scmp.eq.s32.totalorder %s36, 1
      %p374 = por %p372, %p373
      %p375 = scmp.ne.s32.totalorder %s364, %s365
      %p376 = scmp.eq.s32.totalorder %s36, 0
      %p377 = por %p375, %p376
      %p378 = scmp.ne.s32.totalorder %s364, %s365
      %p379 = scmp.eq.s32.totalorder %s37, 1
      %p380 = por %p378, %p379
      %p382 = scmp.ne.s32.totalorder %s365, %s381
      %p383 = scmp.eq.s32.totalorder %s37, 0
      %p384 = por %p382, %p383
      %p385 = scmp.le.s32.totalorder 1, %s31
      %p386 = scmp.lt.s32.totalorder %s31, 3
      %p387 = pnand %p385, %p386
      %p388 = pneg %p387
      // Predicated region
      $region9: #{tpu_custom_call.1} parent=5 // pred_check
        _
      $region10: #{tpu_custom_call.1} parent=5 // pred_check_branch
        %390 = sbr.rel (%p387) target = $region12
      $region11: #{tpu_custom_call.1} parent=5 // pred_region
        %s391 = ssub.s32 %s31, 1
        // Predicated region
        $region13: #{tpu_custom_call.1} parent=11 // pred_check
          %p392 = pneg %p78
        $region14: #{tpu_custom_call.1} parent=11 // pred_check_branch
          %394 = sbr.rel (%p392) target = $region16
        $region15: #{tpu_custom_call.1} parent=11 // pred_region
          %s396 = ssub.s32 256, 256
          %397 = vsyncadd [#allocation6], %s396
          %s398 = sshll.u32 [#allocation5], 4
          %s399 = int_to_ptr.vmem [resolvable:$true] %s398
          %404 = dma.hbm_to_vmem [thread:$0]  %s1, 256, %s399, [#allocation6], 128, 128, 8
        $region16: #{tpu_custom_call.1} parent=11 // pred_fallthru
          _
        // Predicated region
        $region17: #{tpu_custom_call.1} parent=11 // pred_check
          %p405 = pneg %p99
        $region18: #{tpu_custom_call.1} parent=11 // pred_check_branch
          %407 = sbr.rel (%p405) target = $region20
        $region19: #{tpu_custom_call.1} parent=11 // pred_region
          %s409 = ssub.s32 16, 16
          %410 = vsyncadd [#allocation6], %s409
          %s412 = sshll.u32 [#allocation7], 4
          %s413 = int_to_ptr.vmem [resolvable:$true] %s412
          %415 = dma.hbm_to_vmem [thread:$0]  %s2, 16, %s413, [#allocation6]
        $region20: #{tpu_custom_call.1} parent=11 // pred_fallthru
          _
        // Predicated region
        $region21: #{tpu_custom_call.1} parent=11 // pred_check
          %p416 = pneg %p120
        $region22: #{tpu_custom_call.1} parent=11 // pred_check_branch
          %418 = sbr.rel (%p416) target = $region24
        $region23: #{tpu_custom_call.1} parent=11 // pred_region
          %s420 = ssub.s32 2048, 2048
          %421 = vsyncadd [#allocation9], %s420
          %s422 = sshll.u32 [#allocation8], 4
          %s423 = int_to_ptr.vmem [resolvable:$true] %s422
          %428 = dma.hbm_to_vmem [thread:$0]  %s3, 2048, %s423, [#allocation9], 128, 128, 8
        $region24: #{tpu_custom_call.1} parent=11 // pred_fallthru
          _
        // Predicated region
        $region25: #{tpu_custom_call.1} parent=11 // pred_check
          %p429 = pneg %p141
        $region26: #{tpu_custom_call.1} parent=11 // pred_check_branch
          %431 = sbr.rel (%p429) target = $region28
        $region27: #{tpu_custom_call.1} parent=11 // pred_region
          _
        $region28: #{tpu_custom_call.1} parent=11 // pred_fallthru
          _
        // Predicated region
        $region29: #{tpu_custom_call.1} parent=11 // pred_check
          %p432 = pneg %p162
        $region30: #{tpu_custom_call.1} parent=11 // pred_check_branch
          %434 = sbr.rel (%p432) target = $region32
        $region31: #{tpu_custom_call.1} parent=11 // pred_region
          %s436 = ssub.s32 32, 32
          %437 = vsyncadd [#allocation9], %s436
          %s439 = sshll.u32 [#allocation10], 4
          %s440 = int_to_ptr.vmem [resolvable:$true] %s439
          %442 = dma.hbm_to_vmem [thread:$0]  %s5, 32, %s440, [#allocation9]
        $region32: #{tpu_custom_call.1} parent=11 // pred_fallthru
          _
        // Predicated region
        $region33: #{tpu_custom_call.1} parent=11 // pred_check
          %p443 = pneg %p183
        $region34: #{tpu_custom_call.1} parent=11 // pred_check_branch
          %445 = sbr.rel (%p443) target = $region36
        $region35: #{tpu_custom_call.1} parent=11 // pred_region
          %s447 = ssub.s32 2048, 2048
          %448 = vsyncadd [#allocation12], %s447
          %s449 = sshll.u32 [#allocation11], 4
          %s450 = int_to_ptr.vmem [resolvable:$true] %s449
          %455 = dma.hbm_to_vmem [thread:$0]  %s6, 2048, %s450, [#allocation12], 128, 128, 8
        $region36: #{tpu_custom_call.1} parent=11 // pred_fallthru
          _
        // Predicated region
        $region37: #{tpu_custom_call.1} parent=11 // pred_check
          %p456 = pneg %p204
        $region38: #{tpu_custom_call.1} parent=11 // pred_check_branch
          %458 = sbr.rel (%p456) target = $region40
        $region39: #{tpu_custom_call.1} parent=11 // pred_region
          _
        $region40: #{tpu_custom_call.1} parent=11 // pred_fallthru
          _
        // Predicated region
        $region41: #{tpu_custom_call.1} parent=11 // pred_check
          %p459 = pneg %p225
        $region42: #{tpu_custom_call.1} parent=11 // pred_check_branch
          %461 = sbr.rel (%p459) target = $region44
        $region43: #{tpu_custom_call.1} parent=11 // pred_region
          %s463 = ssub.s32 2048, 2048
          %464 = vsyncadd [#allocation12], %s463
          %s465 = sshll.u32 [#allocation13], 4
          %s466 = int_to_ptr.vmem [resolvable:$true] %s465
          %471 = dma.hbm_to_vmem [thread:$0]  %s8, 2048, %s466, [#allocation12], 128, 128, 8
        $region44: #{tpu_custom_call.1} parent=11 // pred_fallthru
          _
        // Predicated region
        $region45: #{tpu_custom_call.1} parent=11 // pred_check
          %p472 = pneg %p246
        $region46: #{tpu_custom_call.1} parent=11 // pred_check_branch
          %474 = sbr.rel (%p472) target = $region48
        $region47: #{tpu_custom_call.1} parent=11 // pred_region
          _
        $region48: #{tpu_custom_call.1} parent=11 // pred_fallthru
          _
        // Predicated region
        $region49: #{tpu_custom_call.1} parent=11 // pred_check
          %p475 = pneg %p267
        $region50: #{tpu_custom_call.1} parent=11 // pred_check_branch
          %477 = sbr.rel (%p475) target = $region52
        $region51: #{tpu_custom_call.1} parent=11 // pred_region
          _
        $region52: #{tpu_custom_call.1} parent=11 // pred_fallthru
          _
        // Predicated region
        $region53: #{tpu_custom_call.1} parent=11 // pred_check
          %p478 = pneg %p288
        $region54: #{tpu_custom_call.1} parent=11 // pred_check_branch
          %480 = sbr.rel (%p478) target = $region56
        $region55: #{tpu_custom_call.1} parent=11 // pred_region
          %s482 = ssub.s32 2048, 2048
          %483 = vsyncadd [#allocation15], %s482
          %s484 = sshll.u32 [#allocation14], 4
          %s485 = int_to_ptr.vmem [resolvable:$true] %s484
          %490 = dma.hbm_to_vmem [thread:$0]  %s11, 2048, %s485, [#allocation15], 128, 128, 8
        $region56: #{tpu_custom_call.1} parent=11 // pred_fallthru
          _
        // Predicated region
        $region57: #{tpu_custom_call.1} parent=11 // pred_check
          %p491 = pneg %p309
        $region58: #{tpu_custom_call.1} parent=11 // pred_check_branch
          %493 = sbr.rel (%p491) target = $region60
        $region59: #{tpu_custom_call.1} parent=11 // pred_region
          _
        $region60: #{tpu_custom_call.1} parent=11 // pred_fallthru
          _
        // Predicated region
        $region61: #{tpu_custom_call.1} parent=11 // pred_check
          %p494 = pneg %p330
        $region62: #{tpu_custom_call.1} parent=11 // pred_check_branch
          %496 = sbr.rel (%p494) target = $region64
        $region63: #{tpu_custom_call.1} parent=11 // pred_region
          %s498 = ssub.s32 2048, 2048
          %499 = vsyncadd [#allocation15], %s498
          %s500 = sshll.u32 [#allocation16], 4
          %s501 = int_to_ptr.vmem [resolvable:$true] %s500
          %506 = dma.hbm_to_vmem [thread:$0]  %s13, 2048, %s501, [#allocation15], 128, 128, 8
        $region64: #{tpu_custom_call.1} parent=11 // pred_fallthru
          _
        // Predicated region
        $region65: #{tpu_custom_call.1} parent=11 // pred_check
          %p507 = pneg %p351
        $region66: #{tpu_custom_call.1} parent=11 // pred_check_branch
          %509 = sbr.rel (%p507) target = $region68
        $region67: #{tpu_custom_call.1} parent=11 // pred_region
          _
        $region68: #{tpu_custom_call.1} parent=11 // pred_fallthru
          _
      $region12: #{tpu_custom_call.1} parent=5 // pred_fallthru
        _
      %p510 = scmp.lt.s32.totalorder %s31, 2
      // Predicated region
      $region69: #{tpu_custom_call.1} parent=5 // pred_check
        %p511 = pneg %p510
      $region70: #{tpu_custom_call.1} parent=5 // pred_check_branch
        %513 = sbr.rel (%p511) target = $region72
      $region71: #{tpu_custom_call.1} parent=5 // pred_region
        // Predicated region
        $region73: #{tpu_custom_call.1} parent=71 // pred_check
          %p514 = pneg %p51
        $region74: #{tpu_custom_call.1} parent=71 // pred_check_branch
          %516 = sbr.rel (%p514) target = $region76
        $region75: #{tpu_custom_call.1} parent=71 // pred_region
          %s517 = sand.u32 %s41, 1
          %s518 = scalar_lea.sflag [#allocation3], %s517
          %s519 = sand.u32 %s41, 1
          %s520 = smul.addr %s519, 8
          %s521 = scalar_lea.vmem [#allocation2], %s520
          %s523 = ssub.s32 128, 128
          %524 = vsyncadd %s518, %s523
          %s525 = smul.addr %s31, 128
          %s526 = scalar_lea.hbm %s0, %s525
          %s528 = sshll.u32 %s521, 4
          %s529 = int_to_ptr.vmem [resolvable:$true] %s528
          %531 = dma.hbm_to_vmem [thread:$0]  %s526, 128, %s529, %s518
        $region76: #{tpu_custom_call.1} parent=71 // pred_fallthru
          _
      $region72: #{tpu_custom_call.1} parent=5 // pred_fallthru
        _
      %p532 = scmp.le.s32.totalorder 1, %s31
      %p533 = scmp.lt.s32.totalorder %s31, 3
      %p534 = pnand %p532, %p533
      %p535 = pneg %p534
      // Predicated region
      $region77: #{tpu_custom_call.1} parent=5 // pred_check
        _
      $region78: #{tpu_custom_call.1} parent=5 // pred_check_branch
        %537 = sbr.rel (%p534) target = $region80
      $region79: #{tpu_custom_call.1} parent=5 // pred_region
        %s538 = ssub.s32 %s31, 1
        %s539 = sand.u32 %s44, 1
        %s540 = scalar_lea.sflag [#allocation3], %s539
        %s541 = sand.u32 %s44, 1
        %s542 = smul.addr %s541, 8
        %s543 = scalar_lea.vmem [#allocation2], %s542
        // Predicated region
        $region81: #{tpu_custom_call.1} parent=79 // pred_check
          %p544 = pneg %p57
        $region82: #{tpu_custom_call.1} parent=79 // pred_check_branch
          %546 = sbr.rel (%p544) target = $region84
        $region83: #{tpu_custom_call.1} parent=79 // pred_region
          %547 = dma.done %s540, 128
        $region84: #{tpu_custom_call.1} parent=79 // pred_fallthru
          _
        // Predicated region
        $region85: #{tpu_custom_call.1} parent=79 // pred_check
          %p548 = pneg %p78
        $region86: #{tpu_custom_call.1} parent=79 // pred_check_branch
          %550 = sbr.rel (%p548) target = $region88
        $region87: #{tpu_custom_call.1} parent=79 // pred_region
          %551 = dma.done [#allocation6], 256
        $region88: #{tpu_custom_call.1} parent=79 // pred_fallthru
          _
        // Predicated region
        $region89: #{tpu_custom_call.1} parent=79 // pred_check
          %p552 = pneg %p99
        $region90: #{tpu_custom_call.1} parent=79 // pred_check_branch
          %554 = sbr.rel (%p552) target = $region92
        $region91: #{tpu_custom_call.1} parent=79 // pred_region
          %555 = dma.done [#allocation6], 16
        $region92: #{tpu_custom_call.1} parent=79 // pred_fallthru
          _
        // Predicated region
        $region93: #{tpu_custom_call.1} parent=79 // pred_check
          %p556 = pneg %p120
        $region94: #{tpu_custom_call.1} parent=79 // pred_check_branch
          %558 = sbr.rel (%p556) target = $region96
        $region95: #{tpu_custom_call.1} parent=79 // pred_region
          %559 = dma.done [#allocation9], 2048
        $region96: #{tpu_custom_call.1} parent=79 // pred_fallthru
          _
        // Predicated region
        $region97: #{tpu_custom_call.1} parent=79 // pred_check
          %p560 = pneg %p162
        $region98: #{tpu_custom_call.1} parent=79 // pred_check_branch
          %562 = sbr.rel (%p560) target = $region100
        $region99: #{tpu_custom_call.1} parent=79 // pred_region
          %563 = dma.done [#allocation9], 32
        $region100: #{tpu_custom_call.1} parent=79 // pred_fallthru
          _
        // Predicated region
        $region101: #{tpu_custom_call.1} parent=79 // pred_check
          %p564 = pneg %p183
        $region102: #{tpu_custom_call.1} parent=79 // pred_check_branch
          %566 = sbr.rel (%p564) target = $region104
        $region103: #{tpu_custom_call.1} parent=79 // pred_region
          %567 = dma.done [#allocation12], 2048
        $region104: #{tpu_custom_call.1} parent=79 // pred_fallthru
          _
        // Predicated region
        $region105: #{tpu_custom_call.1} parent=79 // pred_check
          %p568 = pneg %p225
        $region106: #{tpu_custom_call.1} parent=79 // pred_check_branch
          %570 = sbr.rel (%p568) target = $region108
        $region107: #{tpu_custom_call.1} parent=79 // pred_region
          %571 = dma.done [#allocation12], 2048
        $region108: #{tpu_custom_call.1} parent=79 // pred_fallthru
          _
        // Predicated region
        $region109: #{tpu_custom_call.1} parent=79 // pred_check
          %p572 = pneg %p288
        $region110: #{tpu_custom_call.1} parent=79 // pred_check_branch
          %574 = sbr.rel (%p572) target = $region112
        $region111: #{tpu_custom_call.1} parent=79 // pred_region
          %575 = dma.done [#allocation15], 2048
        $region112: #{tpu_custom_call.1} parent=79 // pred_fallthru
          _
        // Predicated region
        $region113: #{tpu_custom_call.1} parent=79 // pred_check
          %p576 = pneg %p330
        $region114: #{tpu_custom_call.1} parent=79 // pred_check_branch
          %578 = sbr.rel (%p576) target = $region116
        $region115: #{tpu_custom_call.1} parent=79 // pred_region
          %579 = dma.done [#allocation15], 2048
        $region116: #{tpu_custom_call.1} parent=79 // pred_fallthru
          _
        %s580 = sand.u32 %s44, 1
        %s581 = scalar_lea.sflag [#allocation3], %s580
        %s582 = sand.u32 %s44, 1
        %s583 = smul.addr %s582, 8
        %s584 = scalar_lea.vmem [#allocation2], %s583
        %p585 = pneg %p57
        %p586 = pneg %p54
        %p587 = pneg %p78
        %p588 = pneg %p75
        %p589 = pneg %p99
        %p590 = pneg %p96
        %p591 = pneg %p120
        %p592 = pneg %p117
        %p593 = pneg %p141
        %p594 = pneg %p138
        %p595 = pneg %p162
        %p596 = pneg %p159
        %p597 = pneg %p183
        %p598 = pneg %p180
        %p599 = pneg %p204
        %p600 = pneg %p201
        %p601 = pneg %p225
        %p602 = pneg %p222
        %p603 = pneg %p246
        %p604 = pneg %p243
        %p605 = pneg %p267
        %p606 = pneg %p264
        %p607 = pneg %p288
        %p608 = pneg %p285
        %p609 = pneg %p309
        %p610 = pneg %p306
        %p611 = pneg %p330
        %p612 = pneg %p327
        %p613 = pneg %p351
        %p614 = pneg %p348
        %p615 = pneg %p377
        %p616 = pneg %p374
        %s617 = sand.u32 %s364, 1
        %s618 = scalar_lea.sflag [#allocation4], %s617
        %s619 = sand.u32 %s364, 1
        %s620 = smul.addr %s619, 8
        %s621 = scalar_lea.vmem [#allocation17], %s620
        %v622 = vlaneseq
        %v623 = vshrl.u32 %v622, 7
        %vm624 = vcmp.lt.s32.totalorder %v623, 0
        %v625 = vsub.s32 0, %v623
        %v626 = vsel %vm624, %v625, %v623
        %v627 = vshrl.u32 %v626, 3
        %v628 = vand.u32 %v626, 7
        %v629 = vsub.s32 0, %v628
        %v630 = vsel %vm624, %v629, %v628
        %vm631 = vcmp.ne.s32.totalorder %v630, 0
        %vm632 = vcmp.lt.s32.totalorder %v630, 0
        %vm633 = vmand %vm632, %vm631
        %v634 = vadd.s32 %v630, 8
        %v635 = vsel %vm633, %v634, %v630
        %v636 = vld [vmem:[%s543] sm:$0xff]
        %v637 = vld [vmem:[#allocation5] sm:$0xff]
        %v638 = vld [vmem:[#allocation5 + $0x8] sm:$0xff]
        %v639 = vld [vmem:[#allocation7] sm:$0x1]
        %v641 = vlaneseq
        %v642 = vshrl.u32 %v641, 7
        %v643 = vsub.s32 0, %v642
        %v644 = vrot.slane %v639, %v643
        %vm646 = vcmask 130048
        %v648 = vsel %vm646, %v636, 0
        %650 = vmatprep.subr.mxu0 0.0
        %651 = vmatpush1.msra.mxu0 0.0
        %652 = vmatprep.subr.mxu0 0.0
        %653 = vmatpush1.msra.mxu0 0.0
        %654 = vmatprep.subr.mxu0 0.0
        %655 = vmatpush1.msra.mxu0 0.0
        %656 = vmatprep.subr.mxu0 0.0
        %657 = vmatpush1.msra.mxu0 0.0
        %658 = vmatprep.subr.mxu0 0.0
        %659 = vmatpush1.msra.mxu0 0.0
        %660 = vmatprep.subr.mxu0 0.0
        %661 = vmatpush1.msra.mxu0 0.0
        %662 = vmatprep.subr.mxu0 0.0
        %663 = vmatpush1.msra.mxu0 0.0
        %664 = vmatprep.subr.mxu0 0.0
        %665 = vmatpush1.msra.mxu0 0.0
        %666 = vmatprep.subr.mxu0 0.0
        %667 = vmatpush1.msra.mxu0 0.0
        %668 = vmatprep.subr.mxu0 0.0
        %669 = vmatpush1.msra.mxu0 0.0
        %670 = vmatprep.subr.mxu0 0.0
        %671 = vmatpush1.msra.mxu0 0.0
        %672 = vmatprep.subr.mxu0 0.0
        %673 = vmatpush1.msra.mxu0 0.0
        %674 = vmatprep.subr.mxu0 0.0
        %675 = vmatpush1.msra.mxu0 0.0
        %676 = vmatprep.subr.mxu0 0.0
        %677 = vmatpush1.msra.mxu0 0.0
        %678 = vmatprep.subr.mxu0 0.0
        %679 = vmatpush1.msra.mxu0 %v638
        %680 = vmatprep.subr.mxu0 0.0
        %681 = vmatpush1.msra.mxu0 %v637
        %682 = vmatprep.subr.mxu0 0.0
        %683 = vmatpush2.msra.mxu0 0.0
        %684 = vmatprep.subr.mxu0 0.0
        %685 = vmatpush2.msra.mxu0 0.0
        %686 = vmatprep.subr.mxu0 0.0
        %687 = vmatpush2.msra.mxu0 0.0
        %688 = vmatprep.subr.mxu0 0.0
        %689 = vmatpush2.msra.mxu0 0.0
        %690 = vmatprep.subr.mxu0 0.0
        %691 = vmatpush2.msra.mxu0 0.0
        %692 = vmatprep.subr.mxu0 0.0
        %693 = vmatpush2.msra.mxu0 0.0
        %694 = vmatprep.subr.mxu0 0.0
        %695 = vmatpush2.msra.mxu0 0.0
        %696 = vmatprep.subr.mxu0 0.0
        %697 = vmatpush2.msra.mxu0 0.0
        %698 = vmatprep.subr.mxu0 0.0
        %699 = vmatpush2.msra.mxu0 0.0
        %700 = vmatprep.subr.mxu0 0.0
        %701 = vmatpush2.msra.mxu0 0.0
        %702 = vmatprep.subr.mxu0 0.0
        %703 = vmatpush2.msra.mxu0 0.0
        %704 = vmatprep.subr.mxu0 0.0
        %705 = vmatpush2.msra.mxu0 0.0
        %706 = vmatprep.subr.mxu0 0.0
        %707 = vmatpush2.msra.mxu0 0.0
        %708 = vmatprep.subr.mxu0 0.0
        %709 = vmatpush2.msra.mxu0 0.0
        %710 = vmatprep.subr.mxu0 0.0
        %711 = vmatpush2.msra.mxu0 0.0
        %712 = vmatprep.subr.mxu0 0.0
        %713 = vmatpush2.msra.mxu0 0.0
        %714 = vmatprep.mubr.f32.mxu0 0.0
        %715 = vmatmul.mubr.f32.gmra.mxu0 %v648
        %v716 = vpop.f32.mrf.mxu0
        %v717 = vadd.f32 %v644, %v716
        %v718 = vpop.f32.mrf.mxu0
        %719 = vdwg.mxu0
        %v720 = vmax.f32 %v717, 0.0
        %v721 = vld [vmem:[#allocation8] sm:$0xff]
        %v722 = vld [vmem:[#allocation8 + $0x8] sm:$0xff]
        %v723 = vld [vmem:[#allocation8 + $0x10] sm:$0xff]
        %v724 = vld [vmem:[#allocation8 + $0x18] sm:$0xff]
        %v725 = vld [vmem:[#allocation8 + $0x20] sm:$0xff]
        %v726 = vld [vmem:[#allocation8 + $0x28] sm:$0xff]
        %v727 = vld [vmem:[#allocation8 + $0x30] sm:$0xff]
        %v728 = vld [vmem:[#allocation8 + $0x38] sm:$0xff]
        %v729 = vld [vmem:[#allocation8 + $0x40] sm:$0xff]
        %v730 = vld [vmem:[#allocation8 + $0x48] sm:$0xff]
        %v731 = vld [vmem:[#allocation8 + $0x50] sm:$0xff]
        %v732 = vld [vmem:[#allocation8 + $0x58] sm:$0xff]
        %v733 = vld [vmem:[#allocation8 + $0x60] sm:$0xff]
        %v734 = vld [vmem:[#allocation8 + $0x68] sm:$0xff]
        %v735 = vld [vmem:[#allocation8 + $0x70] sm:$0xff]
        %v736 = vld [vmem:[#allocation8 + $0x78] sm:$0xff]
        %737 = vmatprep.subr.mxu0 0.0
        %738 = vmatpush1.msra.mxu0 %v736
        %739 = vmatprep.subr.mxu0 0.0
        %740 = vmatpush1.msra.mxu0 %v735
        %741 = vmatprep.subr.mxu0 0.0
        %742 = vmatpush1.msra.mxu0 %v734
        %743 = vmatprep.subr.mxu0 0.0
        %744 = vmatpush1.msra.mxu0 %v733
        %745 = vmatprep.subr.mxu0 0.0
        %746 = vmatpush1.msra.mxu0 %v732
        %747 = vmatprep.subr.mxu0 0.0
        %748 = vmatpush1.msra.mxu0 %v731
        %749 = vmatprep.subr.mxu0 0.0
        %750 = vmatpush1.msra.mxu0 %v730
        %751 = vmatprep.subr.mxu0 0.0
        %752 = vmatpush1.msra.mxu0 %v729
        %753 = vmatprep.subr.mxu0 0.0
        %754 = vmatpush1.msra.mxu0 %v728
        %755 = vmatprep.subr.mxu0 0.0
        %756 = vmatpush1.msra.mxu0 %v727
        %757 = vmatprep.subr.mxu0 0.0
        %758 = vmatpush1.msra.mxu0 %v726
        %759 = vmatprep.subr.mxu0 0.0
        %760 = vmatpush1.msra.mxu0 %v725
        %761 = vmatprep.subr.mxu0 0.0
        %762 = vmatpush1.msra.mxu0 %v724
        %763 = vmatprep.subr.mxu0 0.0
        %764 = vmatpush1.msra.mxu0 %v723
        %765 = vmatprep.subr.mxu0 0.0
        %766 = vmatpush1.msra.mxu0 %v722
        %767 = vmatprep.subr.mxu0 0.0
        %768 = vmatpush1.msra.mxu0 %v721
        %769 = vmatprep.subr.mxu0 0.0
        %770 = vmatpush2.msra.mxu0 0.0
        %771 = vmatprep.subr.mxu0 0.0
        %772 = vmatpush2.msra.mxu0 0.0
        %773 = vmatprep.subr.mxu0 0.0
        %774 = vmatpush2.msra.mxu0 0.0
        %775 = vmatprep.subr.mxu0 0.0
        %776 = vmatpush2.msra.mxu0 0.0
        %777 = vmatprep.subr.mxu0 0.0
        %778 = vmatpush2.msra.mxu0 0.0
        %779 = vmatprep.subr.mxu0 0.0
        %780 = vmatpush2.msra.mxu0 0.0
        %781 = vmatprep.subr.mxu0 0.0
        %782 = vmatpush2.msra.mxu0 0.0
        %783 = vmatprep.subr.mxu0 0.0
        %784 = vmatpush2.msra.mxu0 0.0
        %785 = vmatprep.subr.mxu0 0.0
        %786 = vmatpush2.msra.mxu0 0.0
        %787 = vmatprep.subr.mxu0 0.0
        %788 = vmatpush2.msra.mxu0 0.0
        %789 = vmatprep.subr.mxu0 0.0
        %790 = vmatpush2.msra.mxu0 0.0
        %791 = vmatprep.subr.mxu0 0.0
        %792 = vmatpush2.msra.mxu0 0.0
        %793 = vmatprep.subr.mxu0 0.0
        %794 = vmatpush2.msra.mxu0 0.0
        %795 = vmatprep.subr.mxu0 0.0
        %796 = vmatpush2.msra.mxu0 0.0
        %797 = vmatprep.subr.mxu0 0.0
        %798 = vmatpush2.msra.mxu0 0.0
        %799 = vmatprep.subr.mxu0 0.0
        %800 = vmatpush2.msra.mxu0 0.0
        %801 = vmatprep.mubr.f32.mxu0 0.0
        %802 = vmatmul.mubr.f32.gmra.mxu0 %v720
        %v803 = vpop.f32.mrf.mxu0
        %v804 = vadd.f32 0.0, %v803
        %v805 = vpop.f32.mrf.mxu0
        %806 = vdwg.mxu0
        %v807 = vld [vmem:[%s4] sm:$0x7]
        %v808 = vrot.slane %v804, 6
        %vm809 = vcmp.ge.s32.totalorder %v635, 2
        %v810 = vsel %vm809, 1, 0
        %vm811 = vcmp.eq.s32.totalorder %v810, 1
        %v812 = vsel %vm811, %v808, 0.0
        %v813 = vlaneseq
        %v814 = vshrl.u32 %v813, 7
        %v815 = vsub.s32 0, %v814
        %v816 = vrot.slane %v807, %v815
        %v817 = vmul.f32 %v816, %v812
        %v818 = vadd.f32 %v804, %v817
        %v819 = vrot.slane %v804, 7
        %vm820 = vcmp.ge.s32.totalorder %v635, 1
        %v821 = vsel %vm820, 1, 0
        %vm822 = vcmp.eq.s32.totalorder %v821, 1
        %v823 = vsel %vm822, %v819, 0.0
        %v824 = vlaneseq
        %v825 = vshrl.u32 %v824, 7
        %v826 = vsub.s32 1, %v825
        %v827 = vrot.slane %v807, %v826
        %v828 = vmul.f32 %v827, %v823
        %v829 = vadd.f32 %v818, %v828
        %v830 = vlaneseq
        %v831 = vshrl.u32 %v830, 7
        %v832 = vsub.s32 2, %v831
        %v833 = vrot.slane %v807, %v832
        %v834 = vmul.f32 %v833, %v804
        %v835 = vadd.f32 %v829, %v834
        %v836 = vld [vmem:[#allocation10] sm:$0x3]
        %v837 = vrot.slane %v804, 1
        %vm838 = vcmp.lt.s32.totalorder %v635, 7
        %v839 = vsel %vm838, 1, 0
        %vm840 = vcmp.eq.s32.totalorder %v839, 1
        %v841 = vsel %vm840, %v837, 0.0
        %v842 = vlaneseq
        %v843 = vshrl.u32 %v842, 7
        %v844 = vsub.s32 0, %v843
        %v845 = vrot.slane %v836, %v844
        %v846 = vmul.f32 %v845, %v841
        %v847 = vadd.f32 %v835, %v846
        %v848 = vrot.slane %v804, 2
        %vm849 = vcmp.lt.s32.totalorder %v635, 6
        %v850 = vsel %vm849, 1, 0
        %vm851 = vcmp.eq.s32.totalorder %v850, 1
        %v852 = vsel %vm851, %v848, 0.0
        %v853 = vlaneseq
        %v854 = vshrl.u32 %v853, 7
        %v855 = vsub.s32 1, %v854
        %v856 = vrot.slane %v836, %v855
        %v857 = vmul.f32 %v856, %v852
        %v858 = vadd.f32 %v847, %v857
        %v859 = vld [vmem:[#allocation11] sm:$0xff]
        %v860 = vld [vmem:[#allocation11 + $0x8] sm:$0xff]
        %v861 = vld [vmem:[#allocation11 + $0x10] sm:$0xff]
        %v862 = vld [vmem:[#allocation11 + $0x18] sm:$0xff]
        %v863 = vld [vmem:[#allocation11 + $0x20] sm:$0xff]
        %v864 = vld [vmem:[#allocation11 + $0x28] sm:$0xff]
        %v865 = vld [vmem:[#allocation11 + $0x30] sm:$0xff]
        %v866 = vld [vmem:[#allocation11 + $0x38] sm:$0xff]
        %v867 = vld [vmem:[#allocation11 + $0x40] sm:$0xff]
        %v868 = vld [vmem:[#allocation11 + $0x48] sm:$0xff]
        %v869 = vld [vmem:[#allocation11 + $0x50] sm:$0xff]
        %v870 = vld [vmem:[#allocation11 + $0x58] sm:$0xff]
        %v871 = vld [vmem:[#allocation11 + $0x60] sm:$0xff]
        %v872 = vld [vmem:[#allocation11 + $0x68] sm:$0xff]
        %v873 = vld [vmem:[#allocation11 + $0x70] sm:$0xff]
        %v874 = vld [vmem:[#allocation11 + $0x78] sm:$0xff]
        %v875 = vld [vmem:[%s7] sm:$0x1]
        %v877 = vlaneseq
        %v878 = vshrl.u32 %v877, 7
        %v879 = vsub.s32 0, %v878
        %v880 = vrot.slane %v875, %v879
        %882 = vmatprep.subr.mxu0 0.0
        %883 = vmatpush1.msra.mxu0 %v874
        %884 = vmatprep.subr.mxu0 0.0
        %885 = vmatpush1.msra.mxu0 %v873
        %886 = vmatprep.subr.mxu0 0.0
        %887 = vmatpush1.msra.mxu0 %v872
        %888 = vmatprep.subr.mxu0 0.0
        %889 = vmatpush1.msra.mxu0 %v871
        %890 = vmatprep.subr.mxu0 0.0
        %891 = vmatpush1.msra.mxu0 %v870
        %892 = vmatprep.subr.mxu0 0.0
        %893 = vmatpush1.msra.mxu0 %v869
        %894 = vmatprep.subr.mxu0 0.0
        %895 = vmatpush1.msra.mxu0 %v868
        %896 = vmatprep.subr.mxu0 0.0
        %897 = vmatpush1.msra.mxu0 %v867
        %898 = vmatprep.subr.mxu0 0.0
        %899 = vmatpush1.msra.mxu0 %v866
        %900 = vmatprep.subr.mxu0 0.0
        %901 = vmatpush1.msra.mxu0 %v865
        %902 = vmatprep.subr.mxu0 0.0
        %903 = vmatpush1.msra.mxu0 %v864
        %904 = vmatprep.subr.mxu0 0.0
        %905 = vmatpush1.msra.mxu0 %v863
        %906 = vmatprep.subr.mxu0 0.0
        %907 = vmatpush1.msra.mxu0 %v862
        %908 = vmatprep.subr.mxu0 0.0
        %909 = vmatpush1.msra.mxu0 %v861
        %910 = vmatprep.subr.mxu0 0.0
        %911 = vmatpush1.msra.mxu0 %v860
        %912 = vmatprep.subr.mxu0 0.0
        %913 = vmatpush1.msra.mxu0 %v859
        %914 = vmatprep.subr.mxu0 0.0
        %915 = vmatpush2.msra.mxu0 0.0
        %916 = vmatprep.subr.mxu0 0.0
        %917 = vmatpush2.msra.mxu0 0.0
        %918 = vmatprep.subr.mxu0 0.0
        %919 = vmatpush2.msra.mxu0 0.0
        %920 = vmatprep.subr.mxu0 0.0
        %921 = vmatpush2.msra.mxu0 0.0
        %922 = vmatprep.subr.mxu0 0.0
        %923 = vmatpush2.msra.mxu0 0.0
        %924 = vmatprep.subr.mxu0 0.0
        %925 = vmatpush2.msra.mxu0 0.0
        %926 = vmatprep.subr.mxu0 0.0
        %927 = vmatpush2.msra.mxu0 0.0
        %928 = vmatprep.subr.mxu0 0.0
        %929 = vmatpush2.msra.mxu0 0.0
        %930 = vmatprep.subr.mxu0 0.0
        %931 = vmatpush2.msra.mxu0 0.0
        %932 = vmatprep.subr.mxu0 0.0
        %933 = vmatpush2.msra.mxu0 0.0
        %934 = vmatprep.subr.mxu0 0.0
        %935 = vmatpush2.msra.mxu0 0.0
        %936 = vmatprep.subr.mxu0 0.0
        %937 = vmatpush2.msra.mxu0 0.0
        %938 = vmatprep.subr.mxu0 0.0
        %939 = vmatpush2.msra.mxu0 0.0
        %940 = vmatprep.subr.mxu0 0.0
        %941 = vmatpush2.msra.mxu0 0.0
        %942 = vmatprep.subr.mxu0 0.0
        %943 = vmatpush2.msra.mxu0 0.0
        %944 = vmatprep.subr.mxu0 0.0
        %945 = vmatpush2.msra.mxu0 0.0
        %946 = vmatprep.mubr.f32.mxu0 0.0
        %947 = vmatmul.mubr.f32.gmra.mxu0 %v858
        %v948 = vpop.f32.mrf.mxu0
        %v949 = vadd.f32 %v880, %v948
        %v950 = vpop.f32.mrf.mxu0
        %951 = vdwg.mxu0
        %v952 = vmax.f32 %v949, 0.0
        %v953 = vld [vmem:[#allocation13] sm:$0xff]
        %v954 = vld [vmem:[#allocation13 + $0x8] sm:$0xff]
        %v955 = vld [vmem:[#allocation13 + $0x10] sm:$0xff]
        %v956 = vld [vmem:[#allocation13 + $0x18] sm:$0xff]
        %v957 = vld [vmem:[#allocation13 + $0x20] sm:$0xff]
        %v958 = vld [vmem:[#allocation13 + $0x28] sm:$0xff]
        %v959 = vld [vmem:[#allocation13 + $0x30] sm:$0xff]
        %v960 = vld [vmem:[#allocation13 + $0x38] sm:$0xff]
        %v961 = vld [vmem:[#allocation13 + $0x40] sm:$0xff]
        %v962 = vld [vmem:[#allocation13 + $0x48] sm:$0xff]
        %v963 = vld [vmem:[#allocation13 + $0x50] sm:$0xff]
        %v964 = vld [vmem:[#allocation13 + $0x58] sm:$0xff]
        %v965 = vld [vmem:[#allocation13 + $0x60] sm:$0xff]
        %v966 = vld [vmem:[#allocation13 + $0x68] sm:$0xff]
        %v967 = vld [vmem:[#allocation13 + $0x70] sm:$0xff]
        %v968 = vld [vmem:[#allocation13 + $0x78] sm:$0xff]
        %969 = vmatprep.subr.mxu0 0.0
        %970 = vmatpush1.msra.mxu0 %v968
        %971 = vmatprep.subr.mxu0 0.0
        %972 = vmatpush1.msra.mxu0 %v967
        %973 = vmatprep.subr.mxu0 0.0
        %974 = vmatpush1.msra.mxu0 %v966
        %975 = vmatprep.subr.mxu0 0.0
        %976 = vmatpush1.msra.mxu0 %v965
        %977 = vmatprep.subr.mxu0 0.0
        %978 = vmatpush1.msra.mxu0 %v964
        %979 = vmatprep.subr.mxu0 0.0
        %980 = vmatpush1.msra.mxu0 %v963
        %981 = vmatprep.subr.mxu0 0.0
        %982 = vmatpush1.msra.mxu0 %v962
        %983 = vmatprep.subr.mxu0 0.0
        %984 = vmatpush1.msra.mxu0 %v961
        %985 = vmatprep.subr.mxu0 0.0
        %986 = vmatpush1.msra.mxu0 %v960
        %987 = vmatprep.subr.mxu0 0.0
        %988 = vmatpush1.msra.mxu0 %v959
        %989 = vmatprep.subr.mxu0 0.0
        %990 = vmatpush1.msra.mxu0 %v958
        %991 = vmatprep.subr.mxu0 0.0
        %992 = vmatpush1.msra.mxu0 %v957
        %993 = vmatprep.subr.mxu0 0.0
        %994 = vmatpush1.msra.mxu0 %v956
        %995 = vmatprep.subr.mxu0 0.0
        %996 = vmatpush1.msra.mxu0 %v955
        %997 = vmatprep.subr.mxu0 0.0
        %998 = vmatpush1.msra.mxu0 %v954
        %999 = vmatprep.subr.mxu0 0.0
        %1000 = vmatpush1.msra.mxu0 %v953
        %1001 = vmatprep.subr.mxu0 0.0
        %1002 = vmatpush2.msra.mxu0 0.0
        %1003 = vmatprep.subr.mxu0 0.0
        %1004 = vmatpush2.msra.mxu0 0.0
        %1005 = vmatprep.subr.mxu0 0.0
        %1006 = vmatpush2.msra.mxu0 0.0
        %1007 = vmatprep.subr.mxu0 0.0
        %1008 = vmatpush2.msra.mxu0 0.0
        %1009 = vmatprep.subr.mxu0 0.0
        %1010 = vmatpush2.msra.mxu0 0.0
        %1011 = vmatprep.subr.mxu0 0.0
        %1012 = vmatpush2.msra.mxu0 0.0
        %1013 = vmatprep.subr.mxu0 0.0
        %1014 = vmatpush2.msra.mxu0 0.0
        %1015 = vmatprep.subr.mxu0 0.0
        %1016 = vmatpush2.msra.mxu0 0.0
        %1017 = vmatprep.subr.mxu0 0.0
        %1018 = vmatpush2.msra.mxu0 0.0
        %1019 = vmatprep.subr.mxu0 0.0
        %1020 = vmatpush2.msra.mxu0 0.0
        %1021 = vmatprep.subr.mxu0 0.0
        %1022 = vmatpush2.msra.mxu0 0.0
        %1023 = vmatprep.subr.mxu0 0.0
        %1024 = vmatpush2.msra.mxu0 0.0
        %1025 = vmatprep.subr.mxu0 0.0
        %1026 = vmatpush2.msra.mxu0 0.0
        %1027 = vmatprep.subr.mxu0 0.0
        %1028 = vmatpush2.msra.mxu0 0.0
        %1029 = vmatprep.subr.mxu0 0.0
        %1030 = vmatpush2.msra.mxu0 0.0
        %1031 = vmatprep.subr.mxu0 0.0
        %1032 = vmatpush2.msra.mxu0 0.0
        %1033 = vmatprep.mubr.f32.mxu0 0.0
        %1034 = vmatmul.mubr.f32.gmra.mxu0 %v952
        %v1035 = vpop.f32.mrf.mxu0
        %v1036 = vadd.f32 0.0, %v1035
        %v1037 = vpop.f32.mrf.mxu0
        %1038 = vdwg.mxu0
        %v1039 = vld [vmem:[%s9] sm:$0x7]
        %v1040 = vrot.slane %v1036, 6
        %v1041 = vsel %vm811, %v1040, 0.0
        %v1042 = vlaneseq
        %v1043 = vshrl.u32 %v1042, 7
        %v1044 = vsub.s32 0, %v1043
        %v1045 = vrot.slane %v1039, %v1044
        %v1046 = vmul.f32 %v1045, %v1041
        %v1047 = vadd.f32 %v1036, %v1046
        %v1048 = vrot.slane %v1036, 7
        %v1049 = vsel %vm822, %v1048, 0.0
        %v1050 = vlaneseq
        %v1051 = vshrl.u32 %v1050, 7
        %v1052 = vsub.s32 1, %v1051
        %v1053 = vrot.slane %v1039, %v1052
        %v1054 = vmul.f32 %v1053, %v1049
        %v1055 = vadd.f32 %v1047, %v1054
        %v1056 = vlaneseq
        %v1057 = vshrl.u32 %v1056, 7
        %v1058 = vsub.s32 2, %v1057
        %v1059 = vrot.slane %v1039, %v1058
        %v1060 = vmul.f32 %v1059, %v1036
        %v1061 = vadd.f32 %v1055, %v1060
        %v1062 = vld [vmem:[%s10] sm:$0x3]
        %v1063 = vrot.slane %v1036, 1
        %v1064 = vsel %vm840, %v1063, 0.0
        %v1065 = vlaneseq
        %v1066 = vshrl.u32 %v1065, 7
        %v1067 = vsub.s32 0, %v1066
        %v1068 = vrot.slane %v1062, %v1067
        %v1069 = vmul.f32 %v1068, %v1064
        %v1070 = vadd.f32 %v1061, %v1069
        %v1071 = vrot.slane %v1036, 2
        %v1072 = vsel %vm851, %v1071, 0.0
        %v1073 = vlaneseq
        %v1074 = vshrl.u32 %v1073, 7
        %v1075 = vsub.s32 1, %v1074
        %v1076 = vrot.slane %v1062, %v1075
        %v1077 = vmul.f32 %v1076, %v1072
        %v1078 = vadd.f32 %v1070, %v1077
        %v1079 = vld [vmem:[#allocation14] sm:$0xff]
        %v1080 = vld [vmem:[#allocation14 + $0x8] sm:$0xff]
        %v1081 = vld [vmem:[#allocation14 + $0x10] sm:$0xff]
        %v1082 = vld [vmem:[#allocation14 + $0x18] sm:$0xff]
        %v1083 = vld [vmem:[#allocation14 + $0x20] sm:$0xff]
        %v1084 = vld [vmem:[#allocation14 + $0x28] sm:$0xff]
        %v1085 = vld [vmem:[#allocation14 + $0x30] sm:$0xff]
        %v1086 = vld [vmem:[#allocation14 + $0x38] sm:$0xff]
        %v1087 = vld [vmem:[#allocation14 + $0x40] sm:$0xff]
        %v1088 = vld [vmem:[#allocation14 + $0x48] sm:$0xff]
        %v1089 = vld [vmem:[#allocation14 + $0x50] sm:$0xff]
        %v1090 = vld [vmem:[#allocation14 + $0x58] sm:$0xff]
        %v1091 = vld [vmem:[#allocation14 + $0x60] sm:$0xff]
        %v1092 = vld [vmem:[#allocation14 + $0x68] sm:$0xff]
        %v1093 = vld [vmem:[#allocation14 + $0x70] sm:$0xff]
        %v1094 = vld [vmem:[#allocation14 + $0x78] sm:$0xff]
        %v1095 = vld [vmem:[%s12] sm:$0x1]
        %v1097 = vlaneseq
        %v1098 = vshrl.u32 %v1097, 7
        %v1099 = vsub.s32 0, %v1098
        %v1100 = vrot.slane %v1095, %v1099
        %1102 = vmatprep.subr.mxu0 0.0
        %1103 = vmatpush1.msra.mxu0 %v1094
        %1104 = vmatprep.subr.mxu0 0.0
        %1105 = vmatpush1.msra.mxu0 %v1093
        %1106 = vmatprep.subr.mxu0 0.0
        %1107 = vmatpush1.msra.mxu0 %v1092
        %1108 = vmatprep.subr.mxu0 0.0
        %1109 = vmatpush1.msra.mxu0 %v1091
        %1110 = vmatprep.subr.mxu0 0.0
        %1111 = vmatpush1.msra.mxu0 %v1090
        %1112 = vmatprep.subr.mxu0 0.0
        %1113 = vmatpush1.msra.mxu0 %v1089
        %1114 = vmatprep.subr.mxu0 0.0
        %1115 = vmatpush1.msra.mxu0 %v1088
        %1116 = vmatprep.subr.mxu0 0.0
        %1117 = vmatpush1.msra.mxu0 %v1087
        %1118 = vmatprep.subr.mxu0 0.0
        %1119 = vmatpush1.msra.mxu0 %v1086
        %1120 = vmatprep.subr.mxu0 0.0
        %1121 = vmatpush1.msra.mxu0 %v1085
        %1122 = vmatprep.subr.mxu0 0.0
        %1123 = vmatpush1.msra.mxu0 %v1084
        %1124 = vmatprep.subr.mxu0 0.0
        %1125 = vmatpush1.msra.mxu0 %v1083
        %1126 = vmatprep.subr.mxu0 0.0
        %1127 = vmatpush1.msra.mxu0 %v1082
        %1128 = vmatprep.subr.mxu0 0.0
        %1129 = vmatpush1.msra.mxu0 %v1081
        %1130 = vmatprep.subr.mxu0 0.0
        %1131 = vmatpush1.msra.mxu0 %v1080
        %1132 = vmatprep.subr.mxu0 0.0
        %1133 = vmatpush1.msra.mxu0 %v1079
        %1134 = vmatprep.subr.mxu0 0.0
        %1135 = vmatpush2.msra.mxu0 0.0
        %1136 = vmatprep.subr.mxu0 0.0
        %1137 = vmatpush2.msra.mxu0 0.0
        %1138 = vmatprep.subr.mxu0 0.0
        %1139 = vmatpush2.msra.mxu0 0.0
        %1140 = vmatprep.subr.mxu0 0.0
        %1141 = vmatpush2.msra.mxu0 0.0
        %1142 = vmatprep.subr.mxu0 0.0
        %1143 = vmatpush2.msra.mxu0 0.0
        %1144 = vmatprep.subr.mxu0 0.0
        %1145 = vmatpush2.msra.mxu0 0.0
        %1146 = vmatprep.subr.mxu0 0.0
        %1147 = vmatpush2.msra.mxu0 0.0
        %1148 = vmatprep.subr.mxu0 0.0
        %1149 = vmatpush2.msra.mxu0 0.0
        %1150 = vmatprep.subr.mxu0 0.0
        %1151 = vmatpush2.msra.mxu0 0.0
        %1152 = vmatprep.subr.mxu0 0.0
        %1153 = vmatpush2.msra.mxu0 0.0
        %1154 = vmatprep.subr.mxu0 0.0
        %1155 = vmatpush2.msra.mxu0 0.0
        %1156 = vmatprep.subr.mxu0 0.0
        %1157 = vmatpush2.msra.mxu0 0.0
        %1158 = vmatprep.subr.mxu0 0.0
        %1159 = vmatpush2.msra.mxu0 0.0
        %1160 = vmatprep.subr.mxu0 0.0
        %1161 = vmatpush2.msra.mxu0 0.0
        %1162 = vmatprep.subr.mxu0 0.0
        %1163 = vmatpush2.msra.mxu0 0.0
        %1164 = vmatprep.subr.mxu0 0.0
        %1165 = vmatpush2.msra.mxu0 0.0
        %1166 = vmatprep.mubr.f32.mxu0 0.0
        %1167 = vmatmul.mubr.f32.gmra.mxu0 %v1078
        %v1168 = vpop.f32.mrf.mxu0
        %v1169 = vadd.f32 %v1100, %v1168
        %v1170 = vpop.f32.mrf.mxu0
        %1171 = vdwg.mxu0
        %v1172 = vmax.f32 %v1169, 0.0
        %v1173 = vld [vmem:[#allocation16] sm:$0xff]
        %v1174 = vld [vmem:[#allocation16 + $0x8] sm:$0xff]
        %v1175 = vld [vmem:[#allocation16 + $0x10] sm:$0xff]
        %v1176 = vld [vmem:[#allocation16 + $0x18] sm:$0xff]
        %v1177 = vld [vmem:[#allocation16 + $0x20] sm:$0xff]
        %v1178 = vld [vmem:[#allocation16 + $0x28] sm:$0xff]
        %v1179 = vld [vmem:[#allocation16 + $0x30] sm:$0xff]
        %v1180 = vld [vmem:[#allocation16 + $0x38] sm:$0xff]
        %v1181 = vld [vmem:[#allocation16 + $0x40] sm:$0xff]
        %v1182 = vld [vmem:[#allocation16 + $0x48] sm:$0xff]
        %v1183 = vld [vmem:[#allocation16 + $0x50] sm:$0xff]
        %v1184 = vld [vmem:[#allocation16 + $0x58] sm:$0xff]
        %v1185 = vld [vmem:[#allocation16 + $0x60] sm:$0xff]
        %v1186 = vld [vmem:[#allocation16 + $0x68] sm:$0xff]
        %v1187 = vld [vmem:[#allocation16 + $0x70] sm:$0xff]
        %v1188 = vld [vmem:[#allocation16 + $0x78] sm:$0xff]
        %v1189 = vld [vmem:[%s14] sm:$0x1]
        %v1191 = vlaneseq
        %v1192 = vshrl.u32 %v1191, 7
        %v1193 = vsub.s32 0, %v1192
        %v1194 = vrot.slane %v1189, %v1193
        %1196 = vmatprep.subr.mxu0 0.0
        %1197 = vmatpush1.msra.mxu0 %v1188
        %1198 = vmatprep.subr.mxu0 0.0
        %1199 = vmatpush1.msra.mxu0 %v1187
        %1200 = vmatprep.subr.mxu0 0.0
        %1201 = vmatpush1.msra.mxu0 %v1186
        %1202 = vmatprep.subr.mxu0 0.0
        %1203 = vmatpush1.msra.mxu0 %v1185
        %1204 = vmatprep.subr.mxu0 0.0
        %1205 = vmatpush1.msra.mxu0 %v1184
        %1206 = vmatprep.subr.mxu0 0.0
        %1207 = vmatpush1.msra.mxu0 %v1183
        %1208 = vmatprep.subr.mxu0 0.0
        %1209 = vmatpush1.msra.mxu0 %v1182
        %1210 = vmatprep.subr.mxu0 0.0
        %1211 = vmatpush1.msra.mxu0 %v1181
        %1212 = vmatprep.subr.mxu0 0.0
        %1213 = vmatpush1.msra.mxu0 %v1180
        %1214 = vmatprep.subr.mxu0 0.0
        %1215 = vmatpush1.msra.mxu0 %v1179
        %1216 = vmatprep.subr.mxu0 0.0
        %1217 = vmatpush1.msra.mxu0 %v1178
        %1218 = vmatprep.subr.mxu0 0.0
        %1219 = vmatpush1.msra.mxu0 %v1177
        %1220 = vmatprep.subr.mxu0 0.0
        %1221 = vmatpush1.msra.mxu0 %v1176
        %1222 = vmatprep.subr.mxu0 0.0
        %1223 = vmatpush1.msra.mxu0 %v1175
        %1224 = vmatprep.subr.mxu0 0.0
        %1225 = vmatpush1.msra.mxu0 %v1174
        %1226 = vmatprep.subr.mxu0 0.0
        %1227 = vmatpush1.msra.mxu0 %v1173
        %1228 = vmatprep.subr.mxu0 0.0
        %1229 = vmatpush2.msra.mxu0 0.0
        %1230 = vmatprep.subr.mxu0 0.0
        %1231 = vmatpush2.msra.mxu0 0.0
        %1232 = vmatprep.subr.mxu0 0.0
        %1233 = vmatpush2.msra.mxu0 0.0
        %1234 = vmatprep.subr.mxu0 0.0
        %1235 = vmatpush2.msra.mxu0 0.0
        %1236 = vmatprep.subr.mxu0 0.0
        %1237 = vmatpush2.msra.mxu0 0.0
        %1238 = vmatprep.subr.mxu0 0.0
        %1239 = vmatpush2.msra.mxu0 0.0
        %1240 = vmatprep.subr.mxu0 0.0
        %1241 = vmatpush2.msra.mxu0 0.0
        %1242 = vmatprep.subr.mxu0 0.0
        %1243 = vmatpush2.msra.mxu0 0.0
        %1244 = vmatprep.subr.mxu0 0.0
        %1245 = vmatpush2.msra.mxu0 0.0
        %1246 = vmatprep.subr.mxu0 0.0
        %1247 = vmatpush2.msra.mxu0 0.0
        %1248 = vmatprep.subr.mxu0 0.0
        %1249 = vmatpush2.msra.mxu0 0.0
        %1250 = vmatprep.subr.mxu0 0.0
        %1251 = vmatpush2.msra.mxu0 0.0
        %1252 = vmatprep.subr.mxu0 0.0
        %1253 = vmatpush2.msra.mxu0 0.0
        %1254 = vmatprep.subr.mxu0 0.0
        %1255 = vmatpush2.msra.mxu0 0.0
        %1256 = vmatprep.subr.mxu0 0.0
        %1257 = vmatpush2.msra.mxu0 0.0
        %1258 = vmatprep.subr.mxu0 0.0
        %1259 = vmatpush2.msra.mxu0 0.0
        %1260 = vmatprep.mubr.f32.mxu0 0.0
        %1261 = vmatmul.mubr.f32.gmra.mxu0 %v1172
        %v1262 = vpop.f32.mrf.mxu0
        %v1263 = vadd.f32 %v1194, %v1262
        %v1264 = vpop.f32.mrf.mxu0
        %1265 = vdwg.mxu0
        %1266 = vst [vmem:[%s621] sm:$0xff] %v1263
        %s1267 = sand.u32 %s364, 1
        %s1268 = scalar_lea.sflag [#allocation4], %s1267
        %s1269 = sand.u32 %s364, 1
        %s1270 = smul.addr %s1269, 8
        %s1271 = scalar_lea.vmem [#allocation17], %s1270
        // Predicated region
        $region117: #{tpu_custom_call.1} parent=79 // pred_check
          %p1272 = pneg %p374
        $region118: #{tpu_custom_call.1} parent=79 // pred_check_branch
          %1274 = sbr.rel (%p1272) target = $region120
        $region119: #{tpu_custom_call.1} parent=79 // pred_region
          %s1276 = ssub.s32 128, 128
          %1277 = vsyncadd %s1268, %s1276
          %s1278 = smul.addr %s36, 128
          %s1279 = scalar_lea.hbm %s15, %s1278
          %s1281 = sshll.u32 %s1271, 4
          %s1282 = int_to_ptr.vmem [resolvable:$true] %s1281
          %1284 = dma.vmem_to_hbm [thread:$0]  %s1282, 128, %s1279, %s1268
        $region120: #{tpu_custom_call.1} parent=79 // pred_fallthru
          _
      $region80: #{tpu_custom_call.1} parent=5 // pred_fallthru
        _
      %p1285 = scmp.le.s32.totalorder 2, %s31
      // Predicated region
      $region121: #{tpu_custom_call.1} parent=5 // pred_check
        %p1286 = pneg %p1285
      $region122: #{tpu_custom_call.1} parent=5 // pred_check_branch
        %1288 = sbr.rel (%p1286) target = $region124
      $region123: #{tpu_custom_call.1} parent=5 // pred_region
        %s1289 = ssub.s32 %s31, 2
        // Predicated region
        $region125: #{tpu_custom_call.1} parent=123 // pred_check
          %p1290 = pneg %p380
        $region126: #{tpu_custom_call.1} parent=123 // pred_check_branch
          %1292 = sbr.rel (%p1290) target = $region128
        $region127: #{tpu_custom_call.1} parent=123 // pred_region
          %s1293 = sand.u32 %s365, 1
          %s1294 = scalar_lea.sflag [#allocation4], %s1293
          %s1295 = sand.u32 %s365, 1
          %s1296 = smul.addr %s1295, 8
          %s1297 = scalar_lea.vmem [#allocation17], %s1296
          %1298 = dma.done %s1294, 128
        $region128: #{tpu_custom_call.1} parent=123 // pred_fallthru
          _
      $region124: #{tpu_custom_call.1} parent=5 // pred_fallthru
        _
    $region6: #{tpu_custom_call.1} parent=1 // loop_footer
      %s35 = sadd.s32 1, %s31
    $region7: #{tpu_custom_call.1} parent=1 // loop_footer_branch
      %30 = sbr.rel target = $region3
    $region8: #{tpu_custom_call.1} parent=1 // loop_exit
      _
    %1299 = vsyncpa [#allocation3], 1
    %s1300 = scalar_lea.sflag [#allocation3], 1
    %1301 = vsyncpa %s1300, 1
    %1302 = vsyncpa [#allocation6], 1
    %1303 = vsyncpa [#allocation9], 1
    %1304 = vsyncpa [#allocation12], 1
    %1305 = vsyncpa [#allocation15], 1
    %1306 = vsyncpa [#allocation4], 1
    %s1307 = scalar_lea.sflag [#allocation4], 1
    %1308 = vsyncpa %s1307, 1

</llo_original>
